<compile_context>
chip_gen: v7x
topology: tpu7x:2x2x1
jax: 0.10.0
libtpu: 0.0.40
codegen_flags: <defaults>
</compile_context>

<pallas_src>
import jax
import jax.numpy as jnp
from jax.experimental import pallas as pl
from jax.experimental.pallas import tpu as pltpu

SELU_ALPHA = 1.6732632423543772848170429916717
SELU_SCALE = 1.0507009873554804934193349852946


def _encoder_gru_kernel(emb_ref, h0_ref, wih_ref, whh_ref, bx_ref, bhn_ref,
                        out_ref, gates_scratch, h_scratch):
    rows, H = out_ref.shape          # rows = T_chunk * B_padded
    B = h_scratch.shape[0]
    Tc = rows // B
    c = pl.program_id(0)

    @pl.when(c == 0)
    def _():
        h_scratch[...] = h0_ref[...]                       # (B, H)

    # --- Hoisted out of the recurrence: SELU (f32) + fused input projection
    # (one MXU matmul per chunk, bf16 operands, f32 accumulation).
    # r/z hidden biases are pre-folded into bx in the wrapper.
    x = emb_ref[...]                                       # (rows, H) f32
    x = SELU_SCALE * jnp.where(
        x > 0.0, x, SELU_ALPHA * (jnp.exp(jnp.minimum(x, 0.0)) - 1.0))
    gates_scratch[...] = (
        jnp.dot(x.astype(jnp.bfloat16), wih_ref[...],
                preferred_element_type=jnp.float32)
        + bx_ref[...])                                     # (rows, 3H) f32

    bhn = bhn_ref[...]                                     # (B, H) f32, hoisted once

    # --- Serial recurrence: hidden state lives in the loop carry (vregs); exactly one
    # gate-fused bf16 MXU dot per step plus f32 elementwise work.
    def step(t, h):
        row0 = pl.multiple_of(t * B, 8)                    # sublane-aligned slice start
        gx = gates_scratch[pl.ds(row0, B), :]              # (B, 3H), folded biases incl.
        gh = jnp.dot(h.astype(jnp.bfloat16), whh_ref[...],
                     preferred_element_type=jnp.float32)   # (B, 3H)
        r = jax.nn.sigmoid(gx[:, :H] + gh[:, :H])
        z = jax.nn.sigmoid(gx[:, H:2 * H] + gh[:, H:2 * H])
        n = jnp.tanh(gx[:, 2 * H:] + r * (gh[:, 2 * H:] + bhn))
        h_new = (1.0 - z) * n + z * h
        out_ref[pl.ds(row0, B), :] = h_new.astype(out_ref.dtype)
        return h_new

    h_final = jax.lax.fori_loop(0, Tc, step, h_scratch[...], unroll=min(Tc, 8))
    h_scratch[...] = h_final                               # persists across chunks


def _vmem_capacity_bytes():
    try:
        info = pltpu.get_tpu_info()
        cap = getattr(info, "vmem_capacity_bytes", None)
        if cap:
            return int(cap)
    except Exception:
        pass
    return 64 * 1024 * 1024        # conservative fallback (v7x per-TC VMEM)


def _derive_time_chunk(S, Bp, H, vmem_limit, requested):
    # Per-timestep VMEM that scales with the chunk length:
    #   emb block + out block (each double-buffered) : 4 * Bp*H*4 bytes
    #   gates scratch (single)                        : Bp*3H*4 bytes
    per_step = Bp * H * 4 * 4 + Bp * 3 * H * 4
    budget = vmem_limit // 2
    tc = max(1, min(requested, budget // max(per_step, 1)))
    return max(1, min(tc, S))


def encoder_rnn_forward(ids, hidden, params, *, time_chunk=32):
    """ids: (S, B) int32 token indices; hidden: (1, B, H) float32.

    Returns (output, hidden) matching torch: output (S, B, H), hidden (1, B, H).
    """
    emb_table = params["embedding"]        # (V, H) f32
    wih = params["wih"]                    # (H, 3H) bf16, gate-fused, pre-transposed, [r|z|n]
    whh = params["whh"]                    # (H, 3H) bf16
    bih = params["bih"]                    # (3H,) f32
    bhh = params["bhh"]                    # (3H,) f32

    S, B = ids.shape
    H = emb_table.shape[1]
    assert H % 128 == 0, "hidden size must be lane-aligned (multiple of 128)"
    H3 = 3 * H

    # Pad batch to the f32 sublane multiple (8); derive chunk size / VMEM limit per chip.
    Bp = ((B + 7) // 8) * 8
    vmem_limit = max(32 * 1024 * 1024,
                     min(int(_vmem_capacity_bytes() * 0.85), 112 * 1024 * 1024))
    Tc = _derive_time_chunk(S, Bp, H, vmem_limit, time_chunk)
    Sp = ((S + Tc - 1) // Tc) * Tc

    # Fold biases: r/z get (b_ih + b_hh) folded into the hoisted input-projection bias;
    # the n gate keeps b_hh_n separate (it sits inside r * (.)), pre-broadcast to (Bp, H)
    # so the in-kernel loop never broadcasts.
    bx = (bih + jnp.concatenate([bhh[:2 * H], jnp.zeros((H,), bih.dtype)]))[None, :]
    bhn = jnp.broadcast_to(bhh[2 * H:][None, :], (Bp, H))

    ids_p = jnp.zeros((Sp, Bp), jnp.int32).at[:S, :B].set(ids)
    h0_p = jnp.zeros((Bp, H), jnp.float32).at[:B].set(hidden[0])

    # Embedding lookup (gather) stays as plain-JAX glue feeding a lane-dense slab.
    emb = jnp.take(emb_table, ids_p.reshape(-1), axis=0)   # (Sp*Bp, H)

    rows_per_chunk = Tc * Bp
    grid = (Sp // Tc,)

    out_flat = pl.pallas_call(
        _encoder_gru_kernel,
        out_shape=jax.ShapeDtypeStruct((Sp * Bp, H), jnp.float32),
        grid_spec=pltpu.PrefetchScalarGridSpec(
            num_scalar_prefetch=0,
            grid=grid,
            in_specs=[
                pl.BlockSpec((rows_per_chunk, H), lambda c: (c, 0)),   # embedded chunk
                pl.BlockSpec((Bp, H), lambda c: (0, 0)),               # h0
                pl.BlockSpec((H, H3), lambda c: (0, 0)),               # W_ih fused (resident)
                pl.BlockSpec((H, H3), lambda c: (0, 0)),               # W_hh fused (resident)
                pl.BlockSpec((1, H3), lambda c: (0, 0)),               # folded input bias
                pl.BlockSpec((Bp, H), lambda c: (0, 0)),               # b_hh_n pre-broadcast
            ],
            out_specs=pl.BlockSpec((rows_per_chunk, H), lambda c: (c, 0)),
            scratch_shapes=[
                pltpu.VMEM((rows_per_chunk, H3), jnp.float32),   # hoisted gate inputs
                pltpu.VMEM((Bp, H), jnp.float32),                # hidden state across chunks
            ],
        ),
        compiler_params=pltpu.CompilerParams(
            dimension_semantics=("arbitrary",),       # time chunks are inherently sequential
            vmem_limit_bytes=vmem_limit,
        ),
    )(emb, h0_p, wih, whh, bx, bhn)

    out = out_flat.reshape(Sp, Bp, H)[:S, :B]
    hn = out[-1:]                                           # (1, B, H)
    return out, hn


def _reference_forward(ids, hidden, params):
    """Plain-JAX reference mirroring torch: embedding -> selu -> GRU (gate order r,z,n).

    Matmul operands are cast to bf16 with f32 accumulation to mirror the kernel's MXU
    precision; all other math is f32.
    """
    emb_table = params["embedding"]
    wih, whh = params["wih"], params["whh"]            # bf16
    bih, bhh = params["bih"], params["bhh"]            # f32
    S, B = ids.shape
    H = emb_table.shape[1]
    emb = jnp.take(emb_table, ids.reshape(-1), axis=0).reshape(S, B, H)
    x_seq = SELU_SCALE * jnp.where(emb > 0, emb, SELU_ALPHA * (jnp.exp(emb) - 1.0))
    h = hidden[0]
    outs = []
    for t in range(S):
        x = x_seq[t]
        gx = jnp.dot(x.astype(jnp.bfloat16), wih,
                     preferred_element_type=jnp.float32) + bih
        gh = jnp.dot(h.astype(jnp.bfloat16), whh,
                     preferred_element_type=jnp.float32) + bhh
        r = jax.nn.sigmoid(gx[:, :H] + gh[:, :H])
        z = jax.nn.sigmoid(gx[:, H:2 * H] + gh[:, H:2 * H])
        n = jnp.tanh(gx[:, 2 * H:] + r * gh[:, 2 * H:])
        h = (1.0 - z) * n + z * h
        outs.append(h)
    return jnp.stack(outs, axis=0), h[None]


def init_params(key, voc_size, hidden_size):
    k_emb, k_wih, k_whh, k_bih, k_bhh = jax.random.split(key, 5)
    scale = 1.0 / jnp.sqrt(hidden_size)
    H3 = 3 * hidden_size
    return {
        "embedding": jax.random.normal(k_emb, (voc_size, hidden_size), jnp.float32),
        # Gate-fused and pre-transposed: wih[:, g*H:(g+1)*H] == torch W_ih[g*H:(g+1)*H, :].T
        # with gate order [r, z, n]; same for whh.  Stored bf16 (MXU-native); biases f32.
        "wih": (scale * jax.random.normal(k_wih, (hidden_size, H3), jnp.float32)
                ).astype(jnp.bfloat16),
        "whh": (scale * jax.random.normal(k_whh, (hidden_size, H3), jnp.float32)
                ).astype(jnp.bfloat16),
        "bih": scale * jax.random.normal(k_bih, (H3,), jnp.float32),
        "bhh": scale * jax.random.normal(k_bhh, (H3,), jnp.float32),
    }


if __name__ == "__main__":
    # Small, deterministic shapes: H lane-aligned (128); batch=2 is padded to 8 internally.
    seq_len, batch, hidden_size, voc_size = 8, 2, 128, 50

    key = jax.random.PRNGKey(0)
    k_params, k_ids = jax.random.split(key)
    params = init_params(k_params, voc_size, hidden_size)

    ids = jax.random.randint(k_ids, (seq_len, batch), 0, voc_size, dtype=jnp.int32)
    h0 = jnp.zeros((1, batch, hidden_size), jnp.float32)   # EncoderRNN.initHidden

    out, hn = encoder_rnn_forward(ids, h0, params)
    out = jax.block_until_ready(out)
    hn = jax.block_until_ready(hn)

    ref_out, ref_hn = _reference_forward(ids, h0, params)
    assert out.shape == (seq_len, batch, hidden_size)
    assert hn.shape == (1, batch, hidden_size)
    # Tolerance covers f32 accumulation-order / bias-folding differences only; the
    # reference mirrors the kernel's bf16-operand / f32-accumulate matmul precision.
    assert jnp.allclose(out, ref_out, atol=2e-3, rtol=2e-3)
    assert jnp.allclose(hn, ref_hn, atol=2e-3, rtol=2e-3)

    print("KERNEL_OK")
</pallas_src>

<mosaic_0001>
module attributes {stable_mosaic.version = 11 : i64} {
  func.func @_encoder_gru_kernel(%arg0: i32, %arg1: memref<64x128xf32, #tpu.memory_space<vmem>>, %arg2: memref<8x128xf32, #tpu.memory_space<vmem>>, %arg3: memref<128x384xbf16, #tpu.memory_space<vmem>>, %arg4: memref<128x384xbf16, #tpu.memory_space<vmem>>, %arg5: memref<1x384xf32, #tpu.memory_space<vmem>>, %arg6: memref<8x128xf32, #tpu.memory_space<vmem>>, %arg7: memref<64x128xf32, #tpu.memory_space<vmem>>, %arg8: memref<64x384xf32, #tpu.memory_space<vmem>>, %arg9: memref<8x128xf32, #tpu.memory_space<vmem>>) attributes {dimension_semantics = [#tpu.dimension_semantics<arbitrary>], iteration_bounds = array<i64: 1>, scalar_prefetch = 0 : i64, scratch_operands = 2 : i64, tpu.core_type = #tpu.core_type<tc>, window_params = [{transform_indices = @transform_0, window_bounds = array<i64: 64, 128>}, {pipeline_mode = #tpu.pipeline_mode<synchronous>, transform_indices = @transform_1, window_bounds = array<i64: 8, 128>}, {pipeline_mode = #tpu.pipeline_mode<synchronous>, transform_indices = @transform_2, window_bounds = array<i64: 128, 384>}, {pipeline_mode = #tpu.pipeline_mode<synchronous>, transform_indices = @transform_3, window_bounds = array<i64: 128, 384>}, {pipeline_mode = #tpu.pipeline_mode<synchronous>, transform_indices = @transform_4, window_bounds = array<i64: 1, 384>}, {pipeline_mode = #tpu.pipeline_mode<synchronous>, transform_indices = @transform_5, window_bounds = array<i64: 8, 128>}, {transform_indices = @transform_6, window_bounds = array<i64: 64, 128>}]} {
    %c0_i32 = arith.constant 0 : i32
    %0 = arith.cmpi eq, %arg0, %c0_i32 : i32
    %1 = arith.extui %0 : i1 to i32
    %c0_i32_0 = arith.constant 0 : i32
    %2 = arith.cmpi ne, %1, %c0_i32_0 : i32
    scf.if %2 {
      %c0_92 = arith.constant 0 : index
      %c0_93 = arith.constant 0 : index
      %314 = vector.load %arg2[%c0_92, %c0_93] : memref<8x128xf32, #tpu.memory_space<vmem>>, vector<8x128xf32>
      %c0_94 = arith.constant 0 : index
      %c0_95 = arith.constant 0 : index
      %315 = vector.load %arg9[%c0_94, %c0_95] : memref<8x128xf32, #tpu.memory_space<vmem>>, vector<8x128xf32>
      tpu.vector_store %arg9[%c0_94, %c0_95], %314 {strides = array<i32>} : memref<8x128xf32, #tpu.memory_space<vmem>>, vector<8x128xf32>,
    } else {
    }
    %c0 = arith.constant 0 : index
    %c0_1 = arith.constant 0 : index
    %3 = vector.load %arg1[%c0, %c0_1] : memref<64x128xf32, #tpu.memory_space<vmem>>, vector<64x128xf32>
    %cst = arith.constant 0.000000e+00 : f32
    %4 = vector.broadcast %cst : f32 to vector<64x128xf32>
    %5 = arith.cmpf ogt, %3, %4 : vector<64x128xf32>
    %cst_2 = arith.constant 0.000000e+00 : f32
    %6 = vector.broadcast %cst_2 : f32 to vector<64x128xf32>
    %7 = arith.minimumf %3, %6 : vector<64x128xf32>
    %8 = math.exp %7 : vector<64x128xf32>
    %cst_3 = arith.constant 1.000000e+00 : f32
    %9 = vector.broadcast %cst_3 : f32 to vector<64x128xf32>
    %10 = arith.subf %8, %9 : vector<64x128xf32>
    %cst_4 = arith.constant 1.67326319 : f32
    %11 = vector.broadcast %cst_4 : f32 to vector<64x128xf32>
    %12 = arith.mulf %11, %10 : vector<64x128xf32>
    %13 = arith.select %5, %3, %12 : vector<64x128xi1>, vector<64x128xf32>
    %cst_5 = arith.constant 1.05070102 : f32
    %14 = vector.broadcast %cst_5 : f32 to vector<64x128xf32>
    %15 = arith.mulf %14, %13 : vector<64x128xf32>
    %16 = arith.truncf %15 : vector<64x128xf32> to vector<64x128xbf16>
    %c0_6 = arith.constant 0 : index
    %c0_7 = arith.constant 0 : index
    %17 = vector.load %arg3[%c0_6, %c0_7] : memref<128x384xbf16, #tpu.memory_space<vmem>>, vector<128x384xbf16>
    %cst_8 = arith.constant dense<0.000000e+00> : vector<64x384xf32>
    %18 = tpu.matmul %16, %17, %cst_8 {dimension_numbers = #tpu.dot_dimension_numbers<[1], [0], [0], [1], [0, 0, 1, 1], [], []>} : vector<64x128xbf16>, vector<128x384xbf16>, vector<64x384xf32> -> vector<64x384xf32>
    %c0_9 = arith.constant 0 : index
    %c0_10 = arith.constant 0 : index
    %19 = vector.load %arg5[%c0_9, %c0_10] : memref<1x384xf32, #tpu.memory_space<vmem>>, vector<1x384xf32>
    %20 = vector.broadcast %19 : vector<1x384xf32> to vector<64x384xf32>
    %21 = arith.addf %18, %20 : vector<64x384xf32>
    %c0_11 = arith.constant 0 : index
    %c0_12 = arith.constant 0 : index
    %22 = vector.load %arg8[%c0_11, %c0_12] : memref<64x384xf32, #tpu.memory_space<vmem>>, vector<64x384xf32>
    tpu.vector_store %arg8[%c0_11, %c0_12], %21 {strides = array<i32>} : memref<64x384xf32, #tpu.memory_space<vmem>>, vector<64x384xf32>,
    %c0_13 = arith.constant 0 : index
    %c0_14 = arith.constant 0 : index
    %23 = vector.load %arg6[%c0_13, %c0_14] : memref<8x128xf32, #tpu.memory_space<vmem>>, vector<8x128xf32>
    %c0_15 = arith.constant 0 : index
    %c0_16 = arith.constant 0 : index
    %24 = vector.load %arg9[%c0_15, %c0_16] : memref<8x128xf32, #tpu.memory_space<vmem>>, vector<8x128xf32>
    %c0_i32_17 = arith.constant 0 : i32
    %c8_i32 = arith.constant 8 : i32
    %25 = arith.muli %c0_i32_17, %c8_i32 : i32
    %26 = tpu.assume_multiple %25, 8 : i32
    %27 = arith.index_cast %26 : i32 to index
    %c0_18 = arith.constant 0 : index
    %28 = vector.load %arg8[%27, %c0_18] : memref<64x384xf32, #tpu.memory_space<vmem>>, vector<8x384xf32>
    %29 = arith.truncf %24 : vector<8x128xf32> to vector<8x128xbf16>
    %c0_19 = arith.constant 0 : index
    %c0_20 = arith.constant 0 : index
    %30 = vector.load %arg4[%c0_19, %c0_20] : memref<128x384xbf16, #tpu.memory_space<vmem>>, vector<128x384xbf16>
    %cst_21 = arith.constant dense<0.000000e+00> : vector<8x384xf32>
    %31 = tpu.matmul %29, %30, %cst_21 {dimension_numbers = #tpu.dot_dimension_numbers<[1], [0], [0], [1], [0, 0, 1, 1], [], []>} : vector<8x128xbf16>, vector<128x384xbf16>, vector<8x384xf32> -> vector<8x384xf32>
    %32 = vector.extract_strided_slice %28 {offsets = [0, 0], sizes = [8, 128], strides = [1, 1]} : vector<8x384xf32> to vector<8x128xf32>
    %33 = vector.extract_strided_slice %31 {offsets = [0, 0], sizes = [8, 128], strides = [1, 1]} : vector<8x384xf32> to vector<8x128xf32>
    %34 = arith.addf %32, %33 : vector<8x128xf32>
    %35 = arith.negf %34 : vector<8x128xf32>
    %36 = math.exp %35 : vector<8x128xf32>
    %cst_22 = arith.constant 1.000000e+00 : f32
    %37 = vector.broadcast %cst_22 : f32 to vector<8x128xf32>
    %38 = arith.addf %37, %36 : vector<8x128xf32>
    %39 = arith.divf %37, %38 : vector<8x128xf32>
    %40 = vector.extract_strided_slice %28 {offsets = [0, 128], sizes = [8, 128], strides = [1, 1]} : vector<8x384xf32> to vector<8x128xf32>
    %41 = vector.extract_strided_slice %31 {offsets = [0, 128], sizes = [8, 128], strides = [1, 1]} : vector<8x384xf32> to vector<8x128xf32>
    %42 = arith.addf %40, %41 : vector<8x128xf32>
    %43 = arith.negf %42 : vector<8x128xf32>
    %44 = math.exp %43 : vector<8x128xf32>
    %cst_23 = arith.constant 1.000000e+00 : f32
    %45 = vector.broadcast %cst_23 : f32 to vector<8x128xf32>
    %46 = arith.addf %45, %44 : vector<8x128xf32>
    %47 = arith.divf %45, %46 : vector<8x128xf32>
    %48 = vector.extract_strided_slice %28 {offsets = [0, 256], sizes = [8, 128], strides = [1, 1]} : vector<8x384xf32> to vector<8x128xf32>
    %49 = vector.extract_strided_slice %31 {offsets = [0, 256], sizes = [8, 128], strides = [1, 1]} : vector<8x384xf32> to vector<8x128xf32>
    %50 = arith.addf %49, %23 : vector<8x128xf32>
    %51 = arith.mulf %39, %50 : vector<8x128xf32>
    %52 = arith.addf %48, %51 : vector<8x128xf32>
    %53 = math.tanh %52 : vector<8x128xf32>
    %cst_24 = arith.constant 1.000000e+00 : f32
    %54 = vector.broadcast %cst_24 : f32 to vector<8x128xf32>
    %55 = arith.subf %54, %47 : vector<8x128xf32>
    %56 = arith.mulf %55, %53 : vector<8x128xf32>
    %57 = arith.mulf %47, %24 : vector<8x128xf32>
    %58 = arith.addf %56, %57 : vector<8x128xf32>
    %59 = arith.index_cast %26 : i32 to index
    %c0_25 = arith.constant 0 : index
    %60 = vector.load %arg7[%59, %c0_25] : memref<64x128xf32, #tpu.memory_space<vmem>>, vector<8x128xf32>
    tpu.vector_store %arg7[%59, %c0_25], %58 {strides = array<i32>} : memref<64x128xf32, #tpu.memory_space<vmem>>, vector<8x128xf32>,
    %c1_i32 = arith.constant 1 : i32
    %c8_i32_26 = arith.constant 8 : i32
    %61 = arith.muli %c1_i32, %c8_i32_26 : i32
    %62 = tpu.assume_multiple %61, 8 : i32
    %63 = arith.index_cast %62 : i32 to index
    %c0_27 = arith.constant 0 : index
    %64 = vector.load %arg8[%63, %c0_27] : memref<64x384xf32, #tpu.memory_space<vmem>>, vector<8x384xf32>
    %65 = arith.truncf %58 : vector<8x128xf32> to vector<8x128xbf16>
    %c0_28 = arith.constant 0 : index
    %c0_29 = arith.constant 0 : index
    %66 = vector.load %arg4[%c0_28, %c0_29] : memref<128x384xbf16, #tpu.memory_space<vmem>>, vector<128x384xbf16>
    %cst_30 = arith.constant dense<0.000000e+00> : vector<8x384xf32>
    %67 = tpu.matmul %65, %66, %cst_30 {dimension_numbers = #tpu.dot_dimension_numbers<[1], [0], [0], [1], [0, 0, 1, 1], [], []>} : vector<8x128xbf16>, vector<128x384xbf16>, vector<8x384xf32> -> vector<8x384xf32>
    %68 = vector.extract_strided_slice %64 {offsets = [0, 0], sizes = [8, 128], strides = [1, 1]} : vector<8x384xf32> to vector<8x128xf32>
    %69 = vector.extract_strided_slice %67 {offsets = [0, 0], sizes = [8, 128], strides = [1, 1]} : vector<8x384xf32> to vector<8x128xf32>
    %70 = arith.addf %68, %69 : vector<8x128xf32>
    %71 = arith.negf %70 : vector<8x128xf32>
    %72 = math.exp %71 : vector<8x128xf32>
    %cst_31 = arith.constant 1.000000e+00 : f32
    %73 = vector.broadcast %cst_31 : f32 to vector<8x128xf32>
    %74 = arith.addf %73, %72 : vector<8x128xf32>
    %75 = arith.divf %73, %74 : vector<8x128xf32>
    %76 = vector.extract_strided_slice %64 {offsets = [0, 128], sizes = [8, 128], strides = [1, 1]} : vector<8x384xf32> to vector<8x128xf32>
    %77 = vector.extract_strided_slice %67 {offsets = [0, 128], sizes = [8, 128], strides = [1, 1]} : vector<8x384xf32> to vector<8x128xf32>
    %78 = arith.addf %76, %77 : vector<8x128xf32>
    %79 = arith.negf %78 : vector<8x128xf32>
    %80 = math.exp %79 : vector<8x128xf32>
    %cst_32 = arith.constant 1.000000e+00 : f32
    %81 = vector.broadcast %cst_32 : f32 to vector<8x128xf32>
    %82 = arith.addf %81, %80 : vector<8x128xf32>
    %83 = arith.divf %81, %82 : vector<8x128xf32>
    %84 = vector.extract_strided_slice %64 {offsets = [0, 256], sizes = [8, 128], strides = [1, 1]} : vector<8x384xf32> to vector<8x128xf32>
    %85 = vector.extract_strided_slice %67 {offsets = [0, 256], sizes = [8, 128], strides = [1, 1]} : vector<8x384xf32> to vector<8x128xf32>
    %86 = arith.addf %85, %23 : vector<8x128xf32>
    %87 = arith.mulf %75, %86 : vector<8x128xf32>
    %88 = arith.addf %84, %87 : vector<8x128xf32>
    %89 = math.tanh %88 : vector<8x128xf32>
    %cst_33 = arith.constant 1.000000e+00 : f32
    %90 = vector.broadcast %cst_33 : f32 to vector<8x128xf32>
    %91 = arith.subf %90, %83 : vector<8x128xf32>
    %92 = arith.mulf %91, %89 : vector<8x128xf32>
    %93 = arith.mulf %83, %58 : vector<8x128xf32>
    %94 = arith.addf %92, %93 : vector<8x128xf32>
    %95 = arith.index_cast %62 : i32 to index
    %c0_34 = arith.constant 0 : index
    %96 = vector.load %arg7[%95, %c0_34] : memref<64x128xf32, #tpu.memory_space<vmem>>, vector<8x128xf32>
    tpu.vector_store %arg7[%95, %c0_34], %94 {strides = array<i32>} : memref<64x128xf32, #tpu.memory_space<vmem>>, vector<8x128xf32>,
    %c2_i32 = arith.constant 2 : i32
    %c8_i32_35 = arith.constant 8 : i32
    %97 = arith.muli %c2_i32, %c8_i32_35 : i32
    %98 = tpu.assume_multiple %97, 8 : i32
    %99 = arith.index_cast %98 : i32 to index
    %c0_36 = arith.constant 0 : index
    %100 = vector.load %arg8[%99, %c0_36] : memref<64x384xf32, #tpu.memory_space<vmem>>, vector<8x384xf32>
    %101 = arith.truncf %94 : vector<8x128xf32> to vector<8x128xbf16>
    %c0_37 = arith.constant 0 : index
    %c0_38 = arith.constant 0 : index
    %102 = vector.load %arg4[%c0_37, %c0_38] : memref<128x384xbf16, #tpu.memory_space<vmem>>, vector<128x384xbf16>
    %cst_39 = arith.constant dense<0.000000e+00> : vector<8x384xf32>
    %103 = tpu.matmul %101, %102, %cst_39 {dimension_numbers = #tpu.dot_dimension_numbers<[1], [0], [0], [1], [0, 0, 1, 1], [], []>} : vector<8x128xbf16>, vector<128x384xbf16>, vector<8x384xf32> -> vector<8x384xf32>
    %104 = vector.extract_strided_slice %100 {offsets = [0, 0], sizes = [8, 128], strides = [1, 1]} : vector<8x384xf32> to vector<8x128xf32>
    %105 = vector.extract_strided_slice %103 {offsets = [0, 0], sizes = [8, 128], strides = [1, 1]} : vector<8x384xf32> to vector<8x128xf32>
    %106 = arith.addf %104, %105 : vector<8x128xf32>
    %107 = arith.negf %106 : vector<8x128xf32>
    %108 = math.exp %107 : vector<8x128xf32>
    %cst_40 = arith.constant 1.000000e+00 : f32
    %109 = vector.broadcast %cst_40 : f32 to vector<8x128xf32>
    %110 = arith.addf %109, %108 : vector<8x128xf32>
    %111 = arith.divf %109, %110 : vector<8x128xf32>
    %112 = vector.extract_strided_slice %100 {offsets = [0, 128], sizes = [8, 128], strides = [1, 1]} : vector<8x384xf32> to vector<8x128xf32>
    %113 = vector.extract_strided_slice %103 {offsets = [0, 128], sizes = [8, 128], strides = [1, 1]} : vector<8x384xf32> to vector<8x128xf32>
    %114 = arith.addf %112, %113 : vector<8x128xf32>
    %115 = arith.negf %114 : vector<8x128xf32>
    %116 = math.exp %115 : vector<8x128xf32>
    %cst_41 = arith.constant 1.000000e+00 : f32
    %117 = vector.broadcast %cst_41 : f32 to vector<8x128xf32>
    %118 = arith.addf %117, %116 : vector<8x128xf32>
    %119 = arith.divf %117, %118 : vector<8x128xf32>
    %120 = vector.extract_strided_slice %100 {offsets = [0, 256], sizes = [8, 128], strides = [1, 1]} : vector<8x384xf32> to vector<8x128xf32>
    %121 = vector.extract_strided_slice %103 {offsets = [0, 256], sizes = [8, 128], strides = [1, 1]} : vector<8x384xf32> to vector<8x128xf32>
    %122 = arith.addf %121, %23 : vector<8x128xf32>
    %123 = arith.mulf %111, %122 : vector<8x128xf32>
    %124 = arith.addf %120, %123 : vector<8x128xf32>
    %125 = math.tanh %124 : vector<8x128xf32>
    %cst_42 = arith.constant 1.000000e+00 : f32
    %126 = vector.broadcast %cst_42 : f32 to vector<8x128xf32>
    %127 = arith.subf %126, %119 : vector<8x128xf32>
    %128 = arith.mulf %127, %125 : vector<8x128xf32>
    %129 = arith.mulf %119, %94 : vector<8x128xf32>
    %130 = arith.addf %128, %129 : vector<8x128xf32>
    %131 = arith.index_cast %98 : i32 to index
    %c0_43 = arith.constant 0 : index
    %132 = vector.load %arg7[%131, %c0_43] : memref<64x128xf32, #tpu.memory_space<vmem>>, vector<8x128xf32>
    tpu.vector_store %arg7[%131, %c0_43], %130 {strides = array<i32>} : memref<64x128xf32, #tpu.memory_space<vmem>>, vector<8x128xf32>,
    %c3_i32 = arith.constant 3 : i32
    %c8_i32_44 = arith.constant 8 : i32
    %133 = arith.muli %c3_i32, %c8_i32_44 : i32
    %134 = tpu.assume_multiple %133, 8 : i32
    %135 = arith.index_cast %134 : i32 to index
    %c0_45 = arith.constant 0 : index
    %136 = vector.load %arg8[%135, %c0_45] : memref<64x384xf32, #tpu.memory_space<vmem>>, vector<8x384xf32>
    %137 = arith.truncf %130 : vector<8x128xf32> to vector<8x128xbf16>
    %c0_46 = arith.constant 0 : index
    %c0_47 = arith.constant 0 : index
    %138 = vector.load %arg4[%c0_46, %c0_47] : memref<128x384xbf16, #tpu.memory_space<vmem>>, vector<128x384xbf16>
    %cst_48 = arith.constant dense<0.000000e+00> : vector<8x384xf32>
    %139 = tpu.matmul %137, %138, %cst_48 {dimension_numbers = #tpu.dot_dimension_numbers<[1], [0], [0], [1], [0, 0, 1, 1], [], []>} : vector<8x128xbf16>, vector<128x384xbf16>, vector<8x384xf32> -> vector<8x384xf32>
    %140 = vector.extract_strided_slice %136 {offsets = [0, 0], sizes = [8, 128], strides = [1, 1]} : vector<8x384xf32> to vector<8x128xf32>
    %141 = vector.extract_strided_slice %139 {offsets = [0, 0], sizes = [8, 128], strides = [1, 1]} : vector<8x384xf32> to vector<8x128xf32>
    %142 = arith.addf %140, %141 : vector<8x128xf32>
    %143 = arith.negf %142 : vector<8x128xf32>
    %144 = math.exp %143 : vector<8x128xf32>
    %cst_49 = arith.constant 1.000000e+00 : f32
    %145 = vector.broadcast %cst_49 : f32 to vector<8x128xf32>
    %146 = arith.addf %145, %144 : vector<8x128xf32>
    %147 = arith.divf %145, %146 : vector<8x128xf32>
    %148 = vector.extract_strided_slice %136 {offsets = [0, 128], sizes = [8, 128], strides = [1, 1]} : vector<8x384xf32> to vector<8x128xf32>
    %149 = vector.extract_strided_slice %139 {offsets = [0, 128], sizes = [8, 128], strides = [1, 1]} : vector<8x384xf32> to vector<8x128xf32>
    %150 = arith.addf %148, %149 : vector<8x128xf32>
    %151 = arith.negf %150 : vector<8x128xf32>
    %152 = math.exp %151 : vector<8x128xf32>
    %cst_50 = arith.constant 1.000000e+00 : f32
    %153 = vector.broadcast %cst_50 : f32 to vector<8x128xf32>
    %154 = arith.addf %153, %152 : vector<8x128xf32>
    %155 = arith.divf %153, %154 : vector<8x128xf32>
    %156 = vector.extract_strided_slice %136 {offsets = [0, 256], sizes = [8, 128], strides = [1, 1]} : vector<8x384xf32> to vector<8x128xf32>
    %157 = vector.extract_strided_slice %139 {offsets = [0, 256], sizes = [8, 128], strides = [1, 1]} : vector<8x384xf32> to vector<8x128xf32>
    %158 = arith.addf %157, %23 : vector<8x128xf32>
    %159 = arith.mulf %147, %158 : vector<8x128xf32>
    %160 = arith.addf %156, %159 : vector<8x128xf32>
    %161 = math.tanh %160 : vector<8x128xf32>
    %cst_51 = arith.constant 1.000000e+00 : f32
    %162 = vector.broadcast %cst_51 : f32 to vector<8x128xf32>
    %163 = arith.subf %162, %155 : vector<8x128xf32>
    %164 = arith.mulf %163, %161 : vector<8x128xf32>
    %165 = arith.mulf %155, %130 : vector<8x128xf32>
    %166 = arith.addf %164, %165 : vector<8x128xf32>
    %167 = arith.index_cast %134 : i32 to index
    %c0_52 = arith.constant 0 : index
    %168 = vector.load %arg7[%167, %c0_52] : memref<64x128xf32, #tpu.memory_space<vmem>>, vector<8x128xf32>
    tpu.vector_store %arg7[%167, %c0_52], %166 {strides = array<i32>} : memref<64x128xf32, #tpu.memory_space<vmem>>, vector<8x128xf32>,
    %c4_i32 = arith.constant 4 : i32
    %c8_i32_53 = arith.constant 8 : i32
    %169 = arith.muli %c4_i32, %c8_i32_53 : i32
    %170 = tpu.assume_multiple %169, 8 : i32
    %171 = arith.index_cast %170 : i32 to index
    %c0_54 = arith.constant 0 : index
    %172 = vector.load %arg8[%171, %c0_54] : memref<64x384xf32, #tpu.memory_space<vmem>>, vector<8x384xf32>
    %173 = arith.truncf %166 : vector<8x128xf32> to vector<8x128xbf16>
    %c0_55 = arith.constant 0 : index
    %c0_56 = arith.constant 0 : index
    %174 = vector.load %arg4[%c0_55, %c0_56] : memref<128x384xbf16, #tpu.memory_space<vmem>>, vector<128x384xbf16>
    %cst_57 = arith.constant dense<0.000000e+00> : vector<8x384xf32>
    %175 = tpu.matmul %173, %174, %cst_57 {dimension_numbers = #tpu.dot_dimension_numbers<[1], [0], [0], [1], [0, 0, 1, 1], [], []>} : vector<8x128xbf16>, vector<128x384xbf16>, vector<8x384xf32> -> vector<8x384xf32>
    %176 = vector.extract_strided_slice %172 {offsets = [0, 0], sizes = [8, 128], strides = [1, 1]} : vector<8x384xf32> to vector<8x128xf32>
    %177 = vector.extract_strided_slice %175 {offsets = [0, 0], sizes = [8, 128], strides = [1, 1]} : vector<8x384xf32> to vector<8x128xf32>
    %178 = arith.addf %176, %177 : vector<8x128xf32>
    %179 = arith.negf %178 : vector<8x128xf32>
    %180 = math.exp %179 : vector<8x128xf32>
    %cst_58 = arith.constant 1.000000e+00 : f32
    %181 = vector.broadcast %cst_58 : f32 to vector<8x128xf32>
    %182 = arith.addf %181, %180 : vector<8x128xf32>
    %183 = arith.divf %181, %182 : vector<8x128xf32>
    %184 = vector.extract_strided_slice %172 {offsets = [0, 128], sizes = [8, 128], strides = [1, 1]} : vector<8x384xf32> to vector<8x128xf32>
    %185 = vector.extract_strided_slice %175 {offsets = [0, 128], sizes = [8, 128], strides = [1, 1]} : vector<8x384xf32> to vector<8x128xf32>
    %186 = arith.addf %184, %185 : vector<8x128xf32>
    %187 = arith.negf %186 : vector<8x128xf32>
    %188 = math.exp %187 : vector<8x128xf32>
    %cst_59 = arith.constant 1.000000e+00 : f32
    %189 = vector.broadcast %cst_59 : f32 to vector<8x128xf32>
    %190 = arith.addf %189, %188 : vector<8x128xf32>
    %191 = arith.divf %189, %190 : vector<8x128xf32>
    %192 = vector.extract_strided_slice %172 {offsets = [0, 256], sizes = [8, 128], strides = [1, 1]} : vector<8x384xf32> to vector<8x128xf32>
    %193 = vector.extract_strided_slice %175 {offsets = [0, 256], sizes = [8, 128], strides = [1, 1]} : vector<8x384xf32> to vector<8x128xf32>
    %194 = arith.addf %193, %23 : vector<8x128xf32>
    %195 = arith.mulf %183, %194 : vector<8x128xf32>
    %196 = arith.addf %192, %195 : vector<8x128xf32>
    %197 = math.tanh %196 : vector<8x128xf32>
    %cst_60 = arith.constant 1.000000e+00 : f32
    %198 = vector.broadcast %cst_60 : f32 to vector<8x128xf32>
    %199 = arith.subf %198, %191 : vector<8x128xf32>
    %200 = arith.mulf %199, %197 : vector<8x128xf32>
    %201 = arith.mulf %191, %166 : vector<8x128xf32>
    %202 = arith.addf %200, %201 : vector<8x128xf32>
    %203 = arith.index_cast %170 : i32 to index
    %c0_61 = arith.constant 0 : index
    %204 = vector.load %arg7[%203, %c0_61] : memref<64x128xf32, #tpu.memory_space<vmem>>, vector<8x128xf32>
    tpu.vector_store %arg7[%203, %c0_61], %202 {strides = array<i32>} : memref<64x128xf32, #tpu.memory_space<vmem>>, vector<8x128xf32>,
    %c5_i32 = arith.constant 5 : i32
    %c8_i32_62 = arith.constant 8 : i32
    %205 = arith.muli %c5_i32, %c8_i32_62 : i32
    %206 = tpu.assume_multiple %205, 8 : i32
    %207 = arith.index_cast %206 : i32 to index
    %c0_63 = arith.constant 0 : index
    %208 = vector.load %arg8[%207, %c0_63] : memref<64x384xf32, #tpu.memory_space<vmem>>, vector<8x384xf32>
    %209 = arith.truncf %202 : vector<8x128xf32> to vector<8x128xbf16>
    %c0_64 = arith.constant 0 : index
    %c0_65 = arith.constant 0 : index
    %210 = vector.load %arg4[%c0_64, %c0_65] : memref<128x384xbf16, #tpu.memory_space<vmem>>, vector<128x384xbf16>
    %cst_66 = arith.constant dense<0.000000e+00> : vector<8x384xf32>
    %211 = tpu.matmul %209, %210, %cst_66 {dimension_numbers = #tpu.dot_dimension_numbers<[1], [0], [0], [1], [0, 0, 1, 1], [], []>} : vector<8x128xbf16>, vector<128x384xbf16>, vector<8x384xf32> -> vector<8x384xf32>
    %212 = vector.extract_strided_slice %208 {offsets = [0, 0], sizes = [8, 128], strides = [1, 1]} : vector<8x384xf32> to vector<8x128xf32>
    %213 = vector.extract_strided_slice %211 {offsets = [0, 0], sizes = [8, 128], strides = [1, 1]} : vector<8x384xf32> to vector<8x128xf32>
    %214 = arith.addf %212, %213 : vector<8x128xf32>
    %215 = arith.negf %214 : vector<8x128xf32>
    %216 = math.exp %215 : vector<8x128xf32>
    %cst_67 = arith.constant 1.000000e+00 : f32
    %217 = vector.broadcast %cst_67 : f32 to vector<8x128xf32>
    %218 = arith.addf %217, %216 : vector<8x128xf32>
    %219 = arith.divf %217, %218 : vector<8x128xf32>
    %220 = vector.extract_strided_slice %208 {offsets = [0, 128], sizes = [8, 128], strides = [1, 1]} : vector<8x384xf32> to vector<8x128xf32>
    %221 = vector.extract_strided_slice %211 {offsets = [0, 128], sizes = [8, 128], strides = [1, 1]} : vector<8x384xf32> to vector<8x128xf32>
    %222 = arith.addf %220, %221 : vector<8x128xf32>
    %223 = arith.negf %222 : vector<8x128xf32>
    %224 = math.exp %223 : vector<8x128xf32>
    %cst_68 = arith.constant 1.000000e+00 : f32
    %225 = vector.broadcast %cst_68 : f32 to vector<8x128xf32>
    %226 = arith.addf %225, %224 : vector<8x128xf32>
    %227 = arith.divf %225, %226 : vector<8x128xf32>
    %228 = vector.extract_strided_slice %208 {offsets = [0, 256], sizes = [8, 128], strides = [1, 1]} : vector<8x384xf32> to vector<8x128xf32>
    %229 = vector.extract_strided_slice %211 {offsets = [0, 256], sizes = [8, 128], strides = [1, 1]} : vector<8x384xf32> to vector<8x128xf32>
    %230 = arith.addf %229, %23 : vector<8x128xf32>
    %231 = arith.mulf %219, %230 : vector<8x128xf32>
    %232 = arith.addf %228, %231 : vector<8x128xf32>
    %233 = math.tanh %232 : vector<8x128xf32>
    %cst_69 = arith.constant 1.000000e+00 : f32
    %234 = vector.broadcast %cst_69 : f32 to vector<8x128xf32>
    %235 = arith.subf %234, %227 : vector<8x128xf32>
    %236 = arith.mulf %235, %233 : vector<8x128xf32>
    %237 = arith.mulf %227, %202 : vector<8x128xf32>
    %238 = arith.addf %236, %237 : vector<8x128xf32>
    %239 = arith.index_cast %206 : i32 to index
    %c0_70 = arith.constant 0 : index
    %240 = vector.load %arg7[%239, %c0_70] : memref<64x128xf32, #tpu.memory_space<vmem>>, vector<8x128xf32>
    tpu.vector_store %arg7[%239, %c0_70], %238 {strides = array<i32>} : memref<64x128xf32, #tpu.memory_space<vmem>>, vector<8x128xf32>,
    %c6_i32 = arith.constant 6 : i32
    %c8_i32_71 = arith.constant 8 : i32
    %241 = arith.muli %c6_i32, %c8_i32_71 : i32
    %242 = tpu.assume_multiple %241, 8 : i32
    %243 = arith.index_cast %242 : i32 to index
    %c0_72 = arith.constant 0 : index
    %244 = vector.load %arg8[%243, %c0_72] : memref<64x384xf32, #tpu.memory_space<vmem>>, vector<8x384xf32>
    %245 = arith.truncf %238 : vector<8x128xf32> to vector<8x128xbf16>
    %c0_73 = arith.constant 0 : index
    %c0_74 = arith.constant 0 : index
    %246 = vector.load %arg4[%c0_73, %c0_74] : memref<128x384xbf16, #tpu.memory_space<vmem>>, vector<128x384xbf16>
    %cst_75 = arith.constant dense<0.000000e+00> : vector<8x384xf32>
    %247 = tpu.matmul %245, %246, %cst_75 {dimension_numbers = #tpu.dot_dimension_numbers<[1], [0], [0], [1], [0, 0, 1, 1], [], []>} : vector<8x128xbf16>, vector<128x384xbf16>, vector<8x384xf32> -> vector<8x384xf32>
    %248 = vector.extract_strided_slice %244 {offsets = [0, 0], sizes = [8, 128], strides = [1, 1]} : vector<8x384xf32> to vector<8x128xf32>
    %249 = vector.extract_strided_slice %247 {offsets = [0, 0], sizes = [8, 128], strides = [1, 1]} : vector<8x384xf32> to vector<8x128xf32>
    %250 = arith.addf %248, %249 : vector<8x128xf32>
    %251 = arith.negf %250 : vector<8x128xf32>
    %252 = math.exp %251 : vector<8x128xf32>
    %cst_76 = arith.constant 1.000000e+00 : f32
    %253 = vector.broadcast %cst_76 : f32 to vector<8x128xf32>
    %254 = arith.addf %253, %252 : vector<8x128xf32>
    %255 = arith.divf %253, %254 : vector<8x128xf32>
    %256 = vector.extract_strided_slice %244 {offsets = [0, 128], sizes = [8, 128], strides = [1, 1]} : vector<8x384xf32> to vector<8x128xf32>
    %257 = vector.extract_strided_slice %247 {offsets = [0, 128], sizes = [8, 128], strides = [1, 1]} : vector<8x384xf32> to vector<8x128xf32>
    %258 = arith.addf %256, %257 : vector<8x128xf32>
    %259 = arith.negf %258 : vector<8x128xf32>
    %260 = math.exp %259 : vector<8x128xf32>
    %cst_77 = arith.constant 1.000000e+00 : f32
    %261 = vector.broadcast %cst_77 : f32 to vector<8x128xf32>
    %262 = arith.addf %261, %260 : vector<8x128xf32>
    %263 = arith.divf %261, %262 : vector<8x128xf32>
    %264 = vector.extract_strided_slice %244 {offsets = [0, 256], sizes = [8, 128], strides = [1, 1]} : vector<8x384xf32> to vector<8x128xf32>
    %265 = vector.extract_strided_slice %247 {offsets = [0, 256], sizes = [8, 128], strides = [1, 1]} : vector<8x384xf32> to vector<8x128xf32>
    %266 = arith.addf %265, %23 : vector<8x128xf32>
    %267 = arith.mulf %255, %266 : vector<8x128xf32>
    %268 = arith.addf %264, %267 : vector<8x128xf32>
    %269 = math.tanh %268 : vector<8x128xf32>
    %cst_78 = arith.constant 1.000000e+00 : f32
    %270 = vector.broadcast %cst_78 : f32 to vector<8x128xf32>
    %271 = arith.subf %270, %263 : vector<8x128xf32>
    %272 = arith.mulf %271, %269 : vector<8x128xf32>
    %273 = arith.mulf %263, %238 : vector<8x128xf32>
    %274 = arith.addf %272, %273 : vector<8x128xf32>
    %275 = arith.index_cast %242 : i32 to index
    %c0_79 = arith.constant 0 : index
    %276 = vector.load %arg7[%275, %c0_79] : memref<64x128xf32, #tpu.memory_space<vmem>>, vector<8x128xf32>
    tpu.vector_store %arg7[%275, %c0_79], %274 {strides = array<i32>} : memref<64x128xf32, #tpu.memory_space<vmem>>, vector<8x128xf32>,
    %c7_i32 = arith.constant 7 : i32
    %c8_i32_80 = arith.constant 8 : i32
    %277 = arith.muli %c7_i32, %c8_i32_80 : i32
    %278 = tpu.assume_multiple %277, 8 : i32
    %279 = arith.index_cast %278 : i32 to index
    %c0_81 = arith.constant 0 : index
    %280 = vector.load %arg8[%279, %c0_81] : memref<64x384xf32, #tpu.memory_space<vmem>>, vector<8x384xf32>
    %281 = arith.truncf %274 : vector<8x128xf32> to vector<8x128xbf16>
    %c0_82 = arith.constant 0 : index
    %c0_83 = arith.constant 0 : index
    %282 = vector.load %arg4[%c0_82, %c0_83] : memref<128x384xbf16, #tpu.memory_space<vmem>>, vector<128x384xbf16>
    %cst_84 = arith.constant dense<0.000000e+00> : vector<8x384xf32>
    %283 = tpu.matmul %281, %282, %cst_84 {dimension_numbers = #tpu.dot_dimension_numbers<[1], [0], [0], [1], [0, 0, 1, 1], [], []>} : vector<8x128xbf16>, vector<128x384xbf16>, vector<8x384xf32> -> vector<8x384xf32>
    %284 = vector.extract_strided_slice %280 {offsets = [0, 0], sizes = [8, 128], strides = [1, 1]} : vector<8x384xf32> to vector<8x128xf32>
    %285 = vector.extract_strided_slice %283 {offsets = [0, 0], sizes = [8, 128], strides = [1, 1]} : vector<8x384xf32> to vector<8x128xf32>
    %286 = arith.addf %284, %285 : vector<8x128xf32>
    %287 = arith.negf %286 : vector<8x128xf32>
    %288 = math.exp %287 : vector<8x128xf32>
    %cst_85 = arith.constant 1.000000e+00 : f32
    %289 = vector.broadcast %cst_85 : f32 to vector<8x128xf32>
    %290 = arith.addf %289, %288 : vector<8x128xf32>
    %291 = arith.divf %289, %290 : vector<8x128xf32>
    %292 = vector.extract_strided_slice %280 {offsets = [0, 128], sizes = [8, 128], strides = [1, 1]} : vector<8x384xf32> to vector<8x128xf32>
    %293 = vector.extract_strided_slice %283 {offsets = [0, 128], sizes = [8, 128], strides = [1, 1]} : vector<8x384xf32> to vector<8x128xf32>
    %294 = arith.addf %292, %293 : vector<8x128xf32>
    %295 = arith.negf %294 : vector<8x128xf32>
    %296 = math.exp %295 : vector<8x128xf32>
    %cst_86 = arith.constant 1.000000e+00 : f32
    %297 = vector.broadcast %cst_86 : f32 to vector<8x128xf32>
    %298 = arith.addf %297, %296 : vector<8x128xf32>
    %299 = arith.divf %297, %298 : vector<8x128xf32>
    %300 = vector.extract_strided_slice %280 {offsets = [0, 256], sizes = [8, 128], strides = [1, 1]} : vector<8x384xf32> to vector<8x128xf32>
    %301 = vector.extract_strided_slice %283 {offsets = [0, 256], sizes = [8, 128], strides = [1, 1]} : vector<8x384xf32> to vector<8x128xf32>
    %302 = arith.addf %301, %23 : vector<8x128xf32>
    %303 = arith.mulf %291, %302 : vector<8x128xf32>
    %304 = arith.addf %300, %303 : vector<8x128xf32>
    %305 = math.tanh %304 : vector<8x128xf32>
    %cst_87 = arith.constant 1.000000e+00 : f32
    %306 = vector.broadcast %cst_87 : f32 to vector<8x128xf32>
    %307 = arith.subf %306, %299 : vector<8x128xf32>
    %308 = arith.mulf %307, %305 : vector<8x128xf32>
    %309 = arith.mulf %299, %274 : vector<8x128xf32>
    %310 = arith.addf %308, %309 : vector<8x128xf32>
    %311 = arith.index_cast %278 : i32 to index
    %c0_88 = arith.constant 0 : index
    %312 = vector.load %arg7[%311, %c0_88] : memref<64x128xf32, #tpu.memory_space<vmem>>, vector<8x128xf32>
    tpu.vector_store %arg7[%311, %c0_88], %310 {strides = array<i32>} : memref<64x128xf32, #tpu.memory_space<vmem>>, vector<8x128xf32>,
    %c8_i32_89 = arith.constant 8 : i32
    %c0_90 = arith.constant 0 : index
    %c0_91 = arith.constant 0 : index
    %313 = vector.load %arg9[%c0_90, %c0_91] : memref<8x128xf32, #tpu.memory_space<vmem>>, vector<8x128xf32>
    tpu.vector_store %arg9[%c0_90, %c0_91], %310 {strides = array<i32>} : memref<8x128xf32, #tpu.memory_space<vmem>>, vector<8x128xf32>,
    return
  }
  func.func @transform_0(%arg0: i32) -> (i32, i32) {
    %c0_i32 = arith.constant 0 : i32
    %c0_i32_0 = arith.constant 0 : i32
    return %arg0, %c0_i32 : i32, i32
  }
  func.func @transform_1(%arg0: i32) -> (i32, i32) {
    %c0_i32 = arith.constant 0 : i32
    %c0_i32_0 = arith.constant 0 : i32
    %c0_i32_1 = arith.constant 0 : i32
    return %c0_i32, %c0_i32_0 : i32, i32
  }
  func.func @transform_2(%arg0: i32) -> (i32, i32) {
    %c0_i32 = arith.constant 0 : i32
    %c0_i32_0 = arith.constant 0 : i32
    %c0_i32_1 = arith.constant 0 : i32
    return %c0_i32, %c0_i32_0 : i32, i32
  }
  func.func @transform_3(%arg0: i32) -> (i32, i32) {
    %c0_i32 = arith.constant 0 : i32
    %c0_i32_0 = arith.constant 0 : i32
    %c0_i32_1 = arith.constant 0 : i32
    return %c0_i32, %c0_i32_0 : i32, i32
  }
  func.func @transform_4(%arg0: i32) -> (i32, i32) {
    %c0_i32 = arith.constant 0 : i32
    %c0_i32_0 = arith.constant 0 : i32
    %c0_i32_1 = arith.constant 0 : i32
    return %c0_i32, %c0_i32_0 : i32, i32
  }
  func.func @transform_5(%arg0: i32) -> (i32, i32) {
    %c0_i32 = arith.constant 0 : i32
    %c0_i32_0 = arith.constant 0 : i32
    %c0_i32_1 = arith.constant 0 : i32
    return %c0_i32, %c0_i32_0 : i32, i32
  }
  func.func @transform_6(%arg0: i32) -> (i32, i32) {
    %c0_i32 = arith.constant 0 : i32
    %c0_i32_0 = arith.constant 0 : i32
    return %arg0, %c0_i32 : i32, i32
  }
}

</mosaic_0001>

<llo_original>
// kernel: tpu_custom_call.1
$region0: #{tpu_custom_call.1}
  #allocation0 [shape = 'u32[]', space=smem, size = 0x4, offset = 0x4, fixed_abs, tag = 'smem constant byte address 0x4 - core index']
  #allocation1 [shape = 'u32[144,128]{1,0:T(1,128)}', space=vmem, size = 0x12000, scoped, tag = 'internal scratch']
  #allocation2 [shape = 'f32[64,384]{1,0:T(8,128)}', space=vmem, size = 0x18000, scoped, tag = 'scratch operand']
  #allocation3 [shape = 'f32[8,128]{1,0:T(8,128)}', space=vmem, size = 0x1000, scoped, tag = 'scratch operand']
  %s0 = inlined_call_operand.hbm [shape: f32[64,128], index: 0, kind: input, shape index: {}]
  %s1 = inlined_call_operand.hbm [shape: f32[8,128], index: 1, kind: input, shape index: {}]
  %s2 = inlined_call_operand.hbm [shape: bf16[128,384], index: 2, kind: input, shape index: {}]
  %s3 = inlined_call_operand.hbm [shape: bf16[128,384], index: 3, kind: input, shape index: {}]
  %s4 = inlined_call_operand.vmem [shape: f32[1,384], index: 4, kind: input, shape index: {}]
  %s5 = inlined_call_operand.vmem [shape: f32[8,128], index: 5, kind: input, shape index: {}]
  %s6 = inlined_call_operand.hbm [shape: f32[64,128], index: 6, kind: output, shape index: {}]
  %s7 = sld [smem:[#allocation0]]
  $region54: #{tpu_custom_call.1} parent=0
    _
  %s9 = ssub.s32 1, %s7
  %s10 = scalar_select 0, %s9, %s7
  $region1: #{tpu_custom_call.1} parent=0
    #allocation4 [shape = 'u8[32768]{0}', space=vmem, size = 0x8000, scoped, tag = 'input window, operand 0, single buffered']
    #allocation5 [shape = 's32[1]{0}', space=sflag, size = 0x4, scoped, tag = 'scoped memory for tpu_custom_call.1']
    #allocation6 [shape = 's32[1]{0}', space=sflag, size = 0x4, scoped, tag = 'scoped memory for tpu_custom_call.1']
    #allocation7 [shape = 'u8[4096]{0}', space=vmem, size = 0x1000, scoped, tag = 'input window, operand 1, single buffered']
    #allocation8 [shape = 's32[1]{0}', space=sflag, size = 0x4, scoped, tag = 'scoped memory for tpu_custom_call.1']
    #allocation9 [shape = 'u8[98304]{0}', space=vmem, size = 0x18000, scoped, tag = 'input window, operand 2, single buffered']
    #allocation10 [shape = 'u8[98304]{0}', space=vmem, size = 0x18000, scoped, tag = 'input window, operand 3, single buffered']
    #allocation11 [shape = 's32[1]{0}', space=sflag, size = 0x4, scoped, tag = 'scoped memory for tpu_custom_call.1']
    #allocation12 [shape = 'u8[32768]{0}', space=vmem, size = 0x8000, scoped, tag = 'output window, operand 0, single buffered']
    %11 = vsyncpa [#allocation5], 0
    %12 = vsyncpa [#allocation8], 0
    %13 = vsyncpa [#allocation11], 0
    %14 = vsyncpa [#allocation6], 0
    // Predicated region
    $region2: #{tpu_custom_call.1} parent=1 // pred_check
      _
    $region3: #{tpu_custom_call.1} parent=1 // pred_check_branch
      %16 = sbr.rel (0) target = $region5
    $region4: #{tpu_custom_call.1} parent=1 // pred_region
      %s18 = ssub.s32 1024, 1024
      %19 = vsyncadd [#allocation5], %s18
      %s20 = sshll.u32 [#allocation4], 4
      %s21 = int_to_ptr.vmem [resolvable:$true] %s20
      %26 = dma.hbm_to_vmem [thread:$0]  %s0, 1024, %s21, [#allocation5], 128, 128, 8
    $region5: #{tpu_custom_call.1} parent=1 // pred_fallthru
      _
    // Predicated region
    $region6: #{tpu_custom_call.1} parent=1 // pred_check
      _
    $region7: #{tpu_custom_call.1} parent=1 // pred_check_branch
      %28 = sbr.rel (0) target = $region9
    $region8: #{tpu_custom_call.1} parent=1 // pred_region
      %s30 = ssub.s32 128, 128
      %31 = vsyncadd [#allocation8], %s30
      %s33 = sshll.u32 [#allocation7], 4
      %s34 = int_to_ptr.vmem [resolvable:$true] %s33
      %36 = dma.hbm_to_vmem [thread:$0]  %s1, 128, %s34, [#allocation8]
    $region9: #{tpu_custom_call.1} parent=1 // pred_fallthru
      _
    // Predicated region
    $region10: #{tpu_custom_call.1} parent=1 // pred_check
      _
    $region11: #{tpu_custom_call.1} parent=1 // pred_check_branch
      %38 = sbr.rel (0) target = $region13
    $region12: #{tpu_custom_call.1} parent=1 // pred_region
      %s40 = ssub.s32 3072, 3072
      %41 = vsyncadd [#allocation8], %s40
      %s42 = sshll.u32 [#allocation9], 4
      %s43 = int_to_ptr.vmem [resolvable:$true] %s42
      %48 = dma.hbm_to_vmem [thread:$0]  %s2, 3072, %s43, [#allocation8], 192, 192, 12
    $region13: #{tpu_custom_call.1} parent=1 // pred_fallthru
      _
    // Predicated region
    $region14: #{tpu_custom_call.1} parent=1 // pred_check
      _
    $region15: #{tpu_custom_call.1} parent=1 // pred_check_branch
      %50 = sbr.rel (0) target = $region17
    $region16: #{tpu_custom_call.1} parent=1 // pred_region
      %s52 = ssub.s32 3072, 3072
      %53 = vsyncadd [#allocation11], %s52
      %s54 = sshll.u32 [#allocation10], 4
      %s55 = int_to_ptr.vmem [resolvable:$true] %s54
      %60 = dma.hbm_to_vmem [thread:$0]  %s3, 3072, %s55, [#allocation11], 192, 192, 12
    $region17: #{tpu_custom_call.1} parent=1 // pred_fallthru
      _
    // Predicated region
    $region18: #{tpu_custom_call.1} parent=1 // pred_check
      _
    $region19: #{tpu_custom_call.1} parent=1 // pred_check_branch
      %62 = sbr.rel (0) target = $region21
    $region20: #{tpu_custom_call.1} parent=1 // pred_region
      _
    $region21: #{tpu_custom_call.1} parent=1 // pred_fallthru
      _
    // Predicated region
    $region22: #{tpu_custom_call.1} parent=1 // pred_check
      _
    $region23: #{tpu_custom_call.1} parent=1 // pred_check_branch
      %64 = sbr.rel (0) target = $region25
    $region24: #{tpu_custom_call.1} parent=1 // pred_region
      _
    $region25: #{tpu_custom_call.1} parent=1 // pred_fallthru
      _
    // Predicated region
    $region26: #{tpu_custom_call.1} parent=1 // pred_check
      _
    $region27: #{tpu_custom_call.1} parent=1 // pred_check_branch
      %66 = sbr.rel (0) target = $region29
    $region28: #{tpu_custom_call.1} parent=1 // pred_region
      %67 = dma.done [#allocation5], 1024
    $region29: #{tpu_custom_call.1} parent=1 // pred_fallthru
      _
    // Predicated region
    $region30: #{tpu_custom_call.1} parent=1 // pred_check
      _
    $region31: #{tpu_custom_call.1} parent=1 // pred_check_branch
      %69 = sbr.rel (0) target = $region33
    $region32: #{tpu_custom_call.1} parent=1 // pred_region
      %70 = dma.done [#allocation8], 128
    $region33: #{tpu_custom_call.1} parent=1 // pred_fallthru
      _
    // Predicated region
    $region34: #{tpu_custom_call.1} parent=1 // pred_check
      _
    $region35: #{tpu_custom_call.1} parent=1 // pred_check_branch
      %72 = sbr.rel (0) target = $region37
    $region36: #{tpu_custom_call.1} parent=1 // pred_region
      %73 = dma.done [#allocation8], 3072
    $region37: #{tpu_custom_call.1} parent=1 // pred_fallthru
      _
    // Predicated region
    $region38: #{tpu_custom_call.1} parent=1 // pred_check
      _
    $region39: #{tpu_custom_call.1} parent=1 // pred_check_branch
      %75 = sbr.rel (0) target = $region41
    $region40: #{tpu_custom_call.1} parent=1 // pred_region
      %76 = dma.done [#allocation11], 3072
    $region41: #{tpu_custom_call.1} parent=1 // pred_fallthru
      _
    %p78 = scmp.eq.s32.totalorder 0, 0
    // Predicated region
    $region42: #{tpu_custom_call.1} parent=1 // pred_check
      %p79 = pneg %p78
    $region43: #{tpu_custom_call.1} parent=1 // pred_check_branch
      %81 = sbr.rel (%p79) target = $region45
    $region44: #{tpu_custom_call.1} parent=1 // pred_region
      %v82 = vld [vmem:[#allocation7] sm:$0xff]
      %83 = vst [vmem:[#allocation3] sm:$0xff] %v82
    $region45: #{tpu_custom_call.1} parent=1 // pred_fallthru
      _
    %v84 = vld [vmem:[#allocation4] sm:$0xff]
    %v85 = vld [vmem:[#allocation4 + $0x8] sm:$0xff]
    %v86 = vld [vmem:[#allocation4 + $0x10] sm:$0xff]
    %v87 = vld [vmem:[#allocation4 + $0x18] sm:$0xff]
    %v88 = vld [vmem:[#allocation4 + $0x20] sm:$0xff]
    %v89 = vld [vmem:[#allocation4 + $0x28] sm:$0xff]
    %v90 = vld [vmem:[#allocation4 + $0x30] sm:$0xff]
    %v91 = vld [vmem:[#allocation4 + $0x38] sm:$0xff]
    %vm92 = vcmp.gt.f32.partialorder %v84, 0.0
    %vm93 = vcmp.gt.f32.partialorder %v85, 0.0
    %vm94 = vcmp.gt.f32.partialorder %v86, 0.0
    %vm95 = vcmp.gt.f32.partialorder %v87, 0.0
    %vm96 = vcmp.gt.f32.partialorder %v88, 0.0
    %vm97 = vcmp.gt.f32.partialorder %v89, 0.0
    %vm98 = vcmp.gt.f32.partialorder %v90, 0.0
    %vm99 = vcmp.gt.f32.partialorder %v91, 0.0
    %v100 = vmin.f32 %v84, 0.0
    %v101 = vmin.f32 %v85, 0.0
    %v102 = vmin.f32 %v86, 0.0
    %v103 = vmin.f32 %v87, 0.0
    %v104 = vmin.f32 %v88, 0.0
    %v105 = vmin.f32 %v89, 0.0
    %v106 = vmin.f32 %v90, 0.0
    %v107 = vmin.f32 %v91, 0.0
    %v108 = vmul.f32 %v100, 1.442695
    %v109 = vpow.pop %v108
    %v110 = vmul.f32 %v101, 1.442695
    %v111 = vpow.pop %v110
    %v112 = vmul.f32 %v102, 1.442695
    %v113 = vpow.pop %v112
    %v114 = vmul.f32 %v103, 1.442695
    %v115 = vpow.pop %v114
    %v116 = vmul.f32 %v104, 1.442695
    %v117 = vpow.pop %v116
    %v118 = vmul.f32 %v105, 1.442695
    %v119 = vpow.pop %v118
    %v120 = vmul.f32 %v106, 1.442695
    %v121 = vpow.pop %v120
    %v122 = vmul.f32 %v107, 1.442695
    %v123 = vpow.pop %v122
    %v124 = vsub.f32 %v109, 1.0
    %v125 = vsub.f32 %v111, 1.0
    %v126 = vsub.f32 %v113, 1.0
    %v127 = vsub.f32 %v115, 1.0
    %v128 = vsub.f32 %v117, 1.0
    %v129 = vsub.f32 %v119, 1.0
    %v130 = vsub.f32 %v121, 1.0
    %v131 = vsub.f32 %v123, 1.0
    %v132 = vmul.f32 %v124, 1.6732632
    %v133 = vmul.f32 %v125, 1.6732632
    %v134 = vmul.f32 %v126, 1.6732632
    %v135 = vmul.f32 %v127, 1.6732632
    %v136 = vmul.f32 %v128, 1.6732632
    %v137 = vmul.f32 %v129, 1.6732632
    %v138 = vmul.f32 %v130, 1.6732632
    %v139 = vmul.f32 %v131, 1.6732632
    %v140 = vsel %vm92, %v84, %v132
    %v141 = vsel %vm93, %v85, %v133
    %v142 = vsel %vm94, %v86, %v134
    %v143 = vsel %vm95, %v87, %v135
    %v144 = vsel %vm96, %v88, %v136
    %v145 = vsel %vm97, %v89, %v137
    %v146 = vsel %vm98, %v90, %v138
    %v147 = vsel %vm99, %v91, %v139
    %v148 = vmul.f32 %v140, 1.050701
    %v149 = vmul.f32 %v141, 1.050701
    %v150 = vmul.f32 %v142, 1.050701
    %v151 = vmul.f32 %v143, 1.050701
    %v152 = vmul.f32 %v144, 1.050701
    %v153 = vmul.f32 %v145, 1.050701
    %v154 = vmul.f32 %v146, 1.050701
    %v155 = vmul.f32 %v147, 1.050701
    %v156 = vpack.c.bf16 %v149, %v148
    %v157 = vpack.c.bf16 %v151, %v150
    %v158 = vpack.c.bf16 %v153, %v152
    %v159 = vpack.c.bf16 %v155, %v154
    %v160 = vld [vmem:[#allocation9] sm:$0xff]
    %v161 = vld [vmem:[#allocation9 + $0x8] sm:$0xf]
    %v162 = vld [vmem:[#allocation9 + $0xc] sm:$0xff]
    %v163 = vld [vmem:[#allocation9 + $0x14] sm:$0xf]
    %v164 = vld [vmem:[#allocation9 + $0x18] sm:$0xff]
    %v165 = vld [vmem:[#allocation9 + $0x20] sm:$0xf]
    %v166 = vld [vmem:[#allocation9 + $0x24] sm:$0xff]
    %v167 = vld [vmem:[#allocation9 + $0x2c] sm:$0xf]
    %v168 = vld [vmem:[#allocation9 + $0x30] sm:$0xff]
    %v169 = vld [vmem:[#allocation9 + $0x38] sm:$0xf]
    %v170 = vld [vmem:[#allocation9 + $0x3c] sm:$0xff]
    %v171 = vld [vmem:[#allocation9 + $0x44] sm:$0xf]
    %v172 = vld [vmem:[#allocation9 + $0x48] sm:$0xff]
    %v173 = vld [vmem:[#allocation9 + $0x50] sm:$0xf]
    %v174 = vld [vmem:[#allocation9 + $0x54] sm:$0xff]
    %v175 = vld [vmem:[#allocation9 + $0x5c] sm:$0xf]
    %v176 = vld [vmem:[#allocation9 + $0x60] sm:$0xff]
    %v177 = vld [vmem:[#allocation9 + $0x68] sm:$0xf]
    %v178 = vld [vmem:[#allocation9 + $0x6c] sm:$0xff]
    %v179 = vld [vmem:[#allocation9 + $0x74] sm:$0xf]
    %v180 = vld [vmem:[#allocation9 + $0x78] sm:$0xff]
    %v181 = vld [vmem:[#allocation9 + $0x80] sm:$0xf]
    %v182 = vld [vmem:[#allocation9 + $0x84] sm:$0xff]
    %v183 = vld [vmem:[#allocation9 + $0x8c] sm:$0xf]
    %v184 = vld [vmem:[#allocation9 + $0x90] sm:$0xff]
    %v185 = vld [vmem:[#allocation9 + $0x98] sm:$0xf]
    %v186 = vld [vmem:[#allocation9 + $0x9c] sm:$0xff]
    %v187 = vld [vmem:[#allocation9 + $0xa4] sm:$0xf]
    %v188 = vld [vmem:[#allocation9 + $0xa8] sm:$0xff]
    %v189 = vld [vmem:[#allocation9 + $0xb0] sm:$0xf]
    %v190 = vld [vmem:[#allocation9 + $0xb4] sm:$0xff]
    %v191 = vld [vmem:[#allocation9 + $0xbc] sm:$0xf]
    %v192 = vld [vmem:[%s4] sm:$0x7]
    %v194 = vlaneseq
    %v195 = vshrl.u32 %v194, 7
    %v196 = vsub.s32 0, %v195
    %v197 = vrot.slane %v192, %v196
    %v198 = vlaneseq
    %v199 = vshrl.u32 %v198, 7
    %v200 = vsub.s32 1, %v199
    %v201 = vrot.slane %v192, %v200
    %v202 = vlaneseq
    %v203 = vshrl.u32 %v202, 7
    %v204 = vsub.s32 2, %v203
    %v205 = vrot.slane %v192, %v204
    %v241 = vunpack.c.l.b16 %v160
    %v242 = vunpack.c.h.b16 %v160
    %v243 = vunpack.c.l.b16 %v161
    %v244 = vunpack.c.l.b16 %v162
    %v245 = vunpack.c.h.b16 %v162
    %v246 = vunpack.c.l.b16 %v163
    %v247 = vunpack.c.l.b16 %v164
    %v248 = vunpack.c.h.b16 %v164
    %v249 = vunpack.c.l.b16 %v165
    %v250 = vunpack.c.l.b16 %v166
    %v251 = vunpack.c.h.b16 %v166
    %v252 = vunpack.c.l.b16 %v167
    %v253 = vunpack.c.l.b16 %v168
    %v254 = vunpack.c.h.b16 %v168
    %v255 = vunpack.c.l.b16 %v169
    %v256 = vunpack.c.l.b16 %v170
    %v257 = vunpack.c.h.b16 %v170
    %v258 = vunpack.c.l.b16 %v171
    %v259 = vunpack.c.l.b16 %v172
    %v260 = vunpack.c.h.b16 %v172
    %v261 = vunpack.c.l.b16 %v173
    %v262 = vunpack.c.l.b16 %v174
    %v263 = vunpack.c.h.b16 %v174
    %v264 = vunpack.c.l.b16 %v175
    %v265 = vunpack.c.l.b16 %v176
    %v266 = vunpack.c.h.b16 %v176
    %v267 = vunpack.c.l.b16 %v177
    %v268 = vunpack.c.l.b16 %v178
    %v269 = vunpack.c.h.b16 %v178
    %v270 = vunpack.c.l.b16 %v179
    %v271 = vunpack.c.l.b16 %v180
    %v272 = vunpack.c.h.b16 %v180
    %v273 = vunpack.c.l.b16 %v181
    %v274 = vunpack.c.l.b16 %v182
    %v275 = vunpack.c.h.b16 %v182
    %v276 = vunpack.c.l.b16 %v183
    %v277 = vunpack.c.l.b16 %v184
    %v278 = vunpack.c.h.b16 %v184
    %v279 = vunpack.c.l.b16 %v185
    %v280 = vunpack.c.l.b16 %v186
    %v281 = vunpack.c.h.b16 %v186
    %v282 = vunpack.c.l.b16 %v187
    %v283 = vunpack.c.l.b16 %v188
    %v284 = vunpack.c.h.b16 %v188
    %v285 = vunpack.c.l.b16 %v189
    %v286 = vunpack.c.l.b16 %v190
    %v287 = vunpack.c.h.b16 %v190
    %v288 = vunpack.c.l.b16 %v191
    %v289 = vpack.c.b16 %v244, %v241
    %v290 = vpack.c.b16 %v245, %v242
    %v291 = vpack.c.b16 %v246, %v243
    %v292 = vpack.c.b16 %v250, %v247
    %v293 = vpack.c.b16 %v251, %v248
    %v294 = vpack.c.b16 %v252, %v249
    %v295 = vpack.c.b16 %v256, %v253
    %v296 = vpack.c.b16 %v257, %v254
    %v297 = vpack.c.b16 %v258, %v255
    %v298 = vpack.c.b16 %v262, %v259
    %v299 = vpack.c.b16 %v263, %v260
    %v300 = vpack.c.b16 %v264, %v261
    %v301 = vpack.c.b16 %v268, %v265
    %v302 = vpack.c.b16 %v269, %v266
    %v303 = vpack.c.b16 %v270, %v267
    %v304 = vpack.c.b16 %v274, %v271
    %v305 = vpack.c.b16 %v275, %v272
    %v306 = vpack.c.b16 %v276, %v273
    %v307 = vpack.c.b16 %v280, %v277
    %v308 = vpack.c.b16 %v281, %v278
    %v309 = vpack.c.b16 %v282, %v279
    %v310 = vpack.c.b16 %v286, %v283
    %v311 = vpack.c.b16 %v287, %v284
    %v312 = vpack.c.b16 %v288, %v285
    %337 = vmatprep.subr.bf16.mxu0 %v290
    %338 = vmatpush1.bf16.msra.mxu0 %v289
    %339 = vmatprep.subr.bf16.mxu0 %v293
    %340 = vmatpush1.bf16.msra.mxu0 %v292
    %341 = vmatprep.subr.bf16.mxu0 %v296
    %342 = vmatpush1.bf16.msra.mxu0 %v295
    %343 = vmatprep.subr.bf16.mxu0 %v299
    %344 = vmatpush1.bf16.msra.mxu0 %v298
    %345 = vmatprep.subr.bf16.mxu0 %v302
    %346 = vmatpush1.bf16.msra.mxu0 %v301
    %347 = vmatprep.subr.bf16.mxu0 %v305
    %348 = vmatpush1.bf16.msra.mxu0 %v304
    %349 = vmatprep.subr.bf16.mxu0 %v308
    %350 = vmatpush1.bf16.msra.mxu0 %v307
    %351 = vmatprep.subr.bf16.mxu0 %v311
    %352 = vmatpush1.bf16.msra.mxu0 %v310
    %353 = vmatprep.subr.bf16.mxu0 0
    %354 = vmatpush1.bf16.msra.mxu0 0
    %355 = vmatprep.subr.bf16.mxu0 0
    %356 = vmatpush1.bf16.msra.mxu0 0
    %357 = vmatprep.subr.bf16.mxu0 0
    %358 = vmatpush1.bf16.msra.mxu0 0
    %359 = vmatprep.subr.bf16.mxu0 0
    %360 = vmatpush1.bf16.msra.mxu0 0
    %361 = vmatprep.subr.bf16.mxu0 0
    %362 = vmatpush1.bf16.msra.mxu0 0
    %363 = vmatprep.subr.bf16.mxu0 0
    %364 = vmatpush1.bf16.msra.mxu0 0
    %365 = vmatprep.subr.bf16.mxu0 0
    %366 = vmatpush1.bf16.msra.mxu0 0
    %367 = vmatprep.subr.bf16.mxu0 0
    %368 = vmatpush1.bf16.msra.mxu0 0
    %369 = vmatprep.mubr.bf16.mxu0 0
    %370 = vmatmul.mubr.bf16.gmra.mrb[0].mxu0 %v156
    %v371 = vpop.f32.mrb[0].mxu0
    %v372 = vadd.f32 %v197, %v371
    %v373 = vpop.f32.mrb[0].mxu0
    %v374 = vadd.f32 %v201, %v373
    %v375 = vpop.f32.mrb[0].mxu0
    %v376 = vadd.f32 %v197, %v375
    %v377 = vpop.f32.mrb[0].mxu0
    %v378 = vadd.f32 %v201, %v377
    %379 = vmatprep.mubr.bf16.mxu0 0
    %380 = vmatmul.mubr.bf16.gmra.mrb[0].mxu0 %v157
    %v381 = vpop.f32.mrb[0].mxu0
    %v382 = vadd.f32 %v197, %v381
    %v383 = vpop.f32.mrb[0].mxu0
    %v384 = vadd.f32 %v201, %v383
    %v385 = vpop.f32.mrb[0].mxu0
    %v386 = vadd.f32 %v197, %v385
    %v387 = vpop.f32.mrb[0].mxu0
    %v388 = vadd.f32 %v201, %v387
    %389 = vmatprep.mubr.bf16.mxu0 0
    %390 = vmatmul.mubr.bf16.gmra.mrb[0].mxu0 %v158
    %v391 = vpop.f32.mrb[0].mxu0
    %v392 = vadd.f32 %v197, %v391
    %v393 = vpop.f32.mrb[0].mxu0
    %v394 = vadd.f32 %v201, %v393
    %v395 = vpop.f32.mrb[0].mxu0
    %v396 = vadd.f32 %v197, %v395
    %v397 = vpop.f32.mrb[0].mxu0
    %v398 = vadd.f32 %v201, %v397
    %399 = vmatprep.mubr.bf16.mxu0 0
    %400 = vmatmul.mubr.bf16.gmra.mrb[0].mxu0 %v159
    %v401 = vpop.f32.mrb[0].mxu0
    %v402 = vadd.f32 %v197, %v401
    %v403 = vpop.f32.mrb[0].mxu0
    %v404 = vadd.f32 %v201, %v403
    %v405 = vpop.f32.mrb[0].mxu0
    %v406 = vadd.f32 %v197, %v405
    %v407 = vpop.f32.mrb[0].mxu0
    %v408 = vadd.f32 %v201, %v407
    %409 = vdwg.mxu0
    %410 = vmatprep.subr.bf16.mxu0 0
    %411 = vmatpush1.bf16.msra.mxu0 %v291
    %412 = vmatprep.subr.bf16.mxu0 0
    %413 = vmatpush1.bf16.msra.mxu0 %v294
    %414 = vmatprep.subr.bf16.mxu0 0
    %415 = vmatpush1.bf16.msra.mxu0 %v297
    %416 = vmatprep.subr.bf16.mxu0 0
    %417 = vmatpush1.bf16.msra.mxu0 %v300
    %418 = vmatprep.subr.bf16.mxu0 0
    %419 = vmatpush1.bf16.msra.mxu0 %v303
    %420 = vmatprep.subr.bf16.mxu0 0
    %421 = vmatpush1.bf16.msra.mxu0 %v306
    %422 = vmatprep.subr.bf16.mxu0 0
    %423 = vmatpush1.bf16.msra.mxu0 %v309
    %424 = vmatprep.subr.bf16.mxu0 0
    %425 = vmatpush1.bf16.msra.mxu0 %v312
    %426 = vmatprep.subr.bf16.mxu0 0
    %427 = vmatpush1.bf16.msra.mxu0 0
    %428 = vmatprep.subr.bf16.mxu0 0
    %429 = vmatpush1.bf16.msra.mxu0 0
    %430 = vmatprep.subr.bf16.mxu0 0
    %431 = vmatpush1.bf16.msra.mxu0 0
    %432 = vmatprep.subr.bf16.mxu0 0
    %433 = vmatpush1.bf16.msra.mxu0 0
    %434 = vmatprep.subr.bf16.mxu0 0
    %435 = vmatpush1.bf16.msra.mxu0 0
    %436 = vmatprep.subr.bf16.mxu0 0
    %437 = vmatpush1.bf16.msra.mxu0 0
    %438 = vmatprep.subr.bf16.mxu0 0
    %439 = vmatpush1.bf16.msra.mxu0 0
    %440 = vmatprep.subr.bf16.mxu0 0
    %441 = vmatpush1.bf16.msra.mxu0 0
    %442 = vmatprep.mubr.bf16.mxu0 0
    %443 = vmatmul.mubr.bf16.gmra.mrb[0].mxu0 %v156
    %v444 = vpop.f32.mrb[0].mxu0
    %v445 = vadd.f32 %v205, %v444
    %v446 = vpop.f32.mrb[0].mxu0
    %v447 = vpop.f32.mrb[0].mxu0
    %v448 = vadd.f32 %v205, %v447
    %v449 = vpop.f32.mrb[0].mxu0
    %450 = vmatprep.mubr.bf16.mxu0 0
    %451 = vmatmul.mubr.bf16.gmra.mrb[0].mxu0 %v157
    %v452 = vpop.f32.mrb[0].mxu0
    %v453 = vadd.f32 %v205, %v452
    %v454 = vpop.f32.mrb[0].mxu0
    %v455 = vpop.f32.mrb[0].mxu0
    %v456 = vadd.f32 %v205, %v455
    %v457 = vpop.f32.mrb[0].mxu0
    %458 = vmatprep.mubr.bf16.mxu0 0
    %459 = vmatmul.mubr.bf16.gmra.mrb[0].mxu0 %v158
    %v460 = vpop.f32.mrb[0].mxu0
    %v461 = vadd.f32 %v205, %v460
    %v462 = vpop.f32.mrb[0].mxu0
    %v463 = vpop.f32.mrb[0].mxu0
    %v464 = vadd.f32 %v205, %v463
    %v465 = vpop.f32.mrb[0].mxu0
    %466 = vmatprep.mubr.bf16.mxu0 0
    %467 = vmatmul.mubr.bf16.gmra.mrb[0].mxu0 %v159
    %v468 = vpop.f32.mrb[0].mxu0
    %v469 = vadd.f32 %v205, %v468
    %v470 = vpop.f32.mrb[0].mxu0
    %v471 = vpop.f32.mrb[0].mxu0
    %v472 = vadd.f32 %v205, %v471
    %v473 = vpop.f32.mrb[0].mxu0
    %474 = vdwg.mxu0
    %475 = vst [vmem:[#allocation2] sm:$0xff] %v372
    %476 = vst [vmem:[#allocation2 + $0x8] sm:$0xff] %v374
    %477 = vst [vmem:[#allocation2 + $0x10] sm:$0xff] %v445
    %478 = vst [vmem:[#allocation2 + $0x18] sm:$0xff] %v376
    %479 = vst [vmem:[#allocation2 + $0x20] sm:$0xff] %v378
    %480 = vst [vmem:[#allocation2 + $0x28] sm:$0xff] %v448
    %481 = vst [vmem:[#allocation2 + $0x30] sm:$0xff] %v382
    %482 = vst [vmem:[#allocation2 + $0x38] sm:$0xff] %v384
    %483 = vst [vmem:[#allocation2 + $0x40] sm:$0xff] %v453
    %484 = vst [vmem:[#allocation2 + $0x48] sm:$0xff] %v386
    %485 = vst [vmem:[#allocation2 + $0x50] sm:$0xff] %v388
    %486 = vst [vmem:[#allocation2 + $0x58] sm:$0xff] %v456
    %487 = vst [vmem:[#allocation2 + $0x60] sm:$0xff] %v392
    %488 = vst [vmem:[#allocation2 + $0x68] sm:$0xff] %v394
    %489 = vst [vmem:[#allocation2 + $0x70] sm:$0xff] %v461
    %490 = vst [vmem:[#allocation2 + $0x78] sm:$0xff] %v396
    %491 = vst [vmem:[#allocation2 + $0x80] sm:$0xff] %v398
    %492 = vst [vmem:[#allocation2 + $0x88] sm:$0xff] %v464
    %493 = vst [vmem:[#allocation2 + $0x90] sm:$0xff] %v402
    %494 = vst [vmem:[#allocation2 + $0x98] sm:$0xff] %v404
    %495 = vst [vmem:[#allocation2 + $0xa0] sm:$0xff] %v469
    %496 = vst [vmem:[#allocation2 + $0xa8] sm:$0xff] %v406
    %497 = vst [vmem:[#allocation2 + $0xb0] sm:$0xff] %v408
    %498 = vst [vmem:[#allocation2 + $0xb8] sm:$0xff] %v472
    %v499 = vld [vmem:[%s5] sm:$0xff]
    %v500 = vld [vmem:[#allocation3] sm:$0xff]
    %s501 = smul.u32 0, 3
    %s502 = smul.addr %s501, 8
    %s503 = scalar_lea.vmem [#allocation2], %s502
    %v504 = vld [vmem:[%s503] sm:$0xff]
    %v505 = vld [vmem:[%s503 + $0x8] sm:$0xff]
    %v506 = vld [vmem:[%s503 + $0x10] sm:$0xff]
    %v507 = vpack.c.bf16 %v500, %v500
    %v508 = vld [vmem:[#allocation10] sm:$0xff]
    %v509 = vld [vmem:[#allocation10 + $0x8] sm:$0xf]
    %v510 = vld [vmem:[#allocation10 + $0xc] sm:$0xff]
    %v511 = vld [vmem:[#allocation10 + $0x14] sm:$0xf]
    %v512 = vld [vmem:[#allocation10 + $0x18] sm:$0xff]
    %v513 = vld [vmem:[#allocation10 + $0x20] sm:$0xf]
    %v514 = vld [vmem:[#allocation10 + $0x24] sm:$0xff]
    %v515 = vld [vmem:[#allocation10 + $0x2c] sm:$0xf]
    %v516 = vld [vmem:[#allocation10 + $0x30] sm:$0xff]
    %v517 = vld [vmem:[#allocation10 + $0x38] sm:$0xf]
    %v518 = vld [vmem:[#allocation10 + $0x3c] sm:$0xff]
    %v519 = vld [vmem:[#allocation10 + $0x44] sm:$0xf]
    %v520 = vld [vmem:[#allocation10 + $0x48] sm:$0xff]
    %v521 = vld [vmem:[#allocation10 + $0x50] sm:$0xf]
    %v522 = vld [vmem:[#allocation10 + $0x54] sm:$0xff]
    %v523 = vld [vmem:[#allocation10 + $0x5c] sm:$0xf]
    %v524 = vld [vmem:[#allocation10 + $0x60] sm:$0xff]
    %v525 = vld [vmem:[#allocation10 + $0x68] sm:$0xf]
    %v526 = vld [vmem:[#allocation10 + $0x6c] sm:$0xff]
    %v527 = vld [vmem:[#allocation10 + $0x74] sm:$0xf]
    %v528 = vld [vmem:[#allocation10 + $0x78] sm:$0xff]
    %v529 = vld [vmem:[#allocation10 + $0x80] sm:$0xf]
    %v530 = vld [vmem:[#allocation10 + $0x84] sm:$0xff]
    %v531 = vld [vmem:[#allocation10 + $0x8c] sm:$0xf]
    %v532 = vld [vmem:[#allocation10 + $0x90] sm:$0xff]
    %v533 = vld [vmem:[#allocation10 + $0x98] sm:$0xf]
    %v534 = vld [vmem:[#allocation10 + $0x9c] sm:$0xff]
    %v535 = vld [vmem:[#allocation10 + $0xa4] sm:$0xf]
    %v536 = vld [vmem:[#allocation10 + $0xa8] sm:$0xff]
    %v537 = vld [vmem:[#allocation10 + $0xb0] sm:$0xf]
    %v538 = vld [vmem:[#allocation10 + $0xb4] sm:$0xff]
    %v539 = vld [vmem:[#allocation10 + $0xbc] sm:$0xf]
    %v572 = vunpack.c.l.b16 %v508
    %v573 = vunpack.c.h.b16 %v508
    %v574 = vunpack.c.l.b16 %v509
    %v575 = vunpack.c.l.b16 %v510
    %v576 = vunpack.c.h.b16 %v510
    %v577 = vunpack.c.l.b16 %v511
    %v578 = vunpack.c.l.b16 %v512
    %v579 = vunpack.c.h.b16 %v512
    %v580 = vunpack.c.l.b16 %v513
    %v581 = vunpack.c.l.b16 %v514
    %v582 = vunpack.c.h.b16 %v514
    %v583 = vunpack.c.l.b16 %v515
    %v584 = vunpack.c.l.b16 %v516
    %v585 = vunpack.c.h.b16 %v516
    %v586 = vunpack.c.l.b16 %v517
    %v587 = vunpack.c.l.b16 %v518
    %v588 = vunpack.c.h.b16 %v518
    %v589 = vunpack.c.l.b16 %v519
    %v590 = vunpack.c.l.b16 %v520
    %v591 = vunpack.c.h.b16 %v520
    %v592 = vunpack.c.l.b16 %v521
    %v593 = vunpack.c.l.b16 %v522
    %v594 = vunpack.c.h.b16 %v522
    %v595 = vunpack.c.l.b16 %v523
    %v596 = vunpack.c.l.b16 %v524
    %v597 = vunpack.c.h.b16 %v524
    %v598 = vunpack.c.l.b16 %v525
    %v599 = vunpack.c.l.b16 %v526
    %v600 = vunpack.c.h.b16 %v526
    %v601 = vunpack.c.l.b16 %v527
    %v602 = vunpack.c.l.b16 %v528
    %v603 = vunpack.c.h.b16 %v528
    %v604 = vunpack.c.l.b16 %v529
    %v605 = vunpack.c.l.b16 %v530
    %v606 = vunpack.c.h.b16 %v530
    %v607 = vunpack.c.l.b16 %v531
    %v608 = vunpack.c.l.b16 %v532
    %v609 = vunpack.c.h.b16 %v532
    %v610 = vunpack.c.l.b16 %v533
    %v611 = vunpack.c.l.b16 %v534
    %v612 = vunpack.c.h.b16 %v534
    %v613 = vunpack.c.l.b16 %v535
    %v614 = vunpack.c.l.b16 %v536
    %v615 = vunpack.c.h.b16 %v536
    %v616 = vunpack.c.l.b16 %v537
    %v617 = vunpack.c.l.b16 %v538
    %v618 = vunpack.c.h.b16 %v538
    %v619 = vunpack.c.l.b16 %v539
    %v620 = vpack.c.b16 %v575, %v572
    %v621 = vpack.c.b16 %v576, %v573
    %v622 = vpack.c.b16 %v577, %v574
    %v623 = vpack.c.b16 %v581, %v578
    %v624 = vpack.c.b16 %v582, %v579
    %v625 = vpack.c.b16 %v583, %v580
    %v626 = vpack.c.b16 %v587, %v584
    %v627 = vpack.c.b16 %v588, %v585
    %v628 = vpack.c.b16 %v589, %v586
    %v629 = vpack.c.b16 %v593, %v590
    %v630 = vpack.c.b16 %v594, %v591
    %v631 = vpack.c.b16 %v595, %v592
    %v632 = vpack.c.b16 %v599, %v596
    %v633 = vpack.c.b16 %v600, %v597
    %v634 = vpack.c.b16 %v601, %v598
    %v635 = vpack.c.b16 %v605, %v602
    %v636 = vpack.c.b16 %v606, %v603
    %v637 = vpack.c.b16 %v607, %v604
    %v638 = vpack.c.b16 %v611, %v608
    %v639 = vpack.c.b16 %v612, %v609
    %v640 = vpack.c.b16 %v613, %v610
    %v641 = vpack.c.b16 %v617, %v614
    %v642 = vpack.c.b16 %v618, %v615
    %v643 = vpack.c.b16 %v619, %v616
    %668 = vmatprep.subr.bf16.mxu0 %v621
    %669 = vmatpush1.bf16.msra.mxu0 %v620
    %670 = vmatprep.subr.bf16.mxu0 %v624
    %671 = vmatpush1.bf16.msra.mxu0 %v623
    %672 = vmatprep.subr.bf16.mxu0 %v627
    %673 = vmatpush1.bf16.msra.mxu0 %v626
    %674 = vmatprep.subr.bf16.mxu0 %v630
    %675 = vmatpush1.bf16.msra.mxu0 %v629
    %676 = vmatprep.subr.bf16.mxu0 %v633
    %677 = vmatpush1.bf16.msra.mxu0 %v632
    %678 = vmatprep.subr.bf16.mxu0 %v636
    %679 = vmatpush1.bf16.msra.mxu0 %v635
    %680 = vmatprep.subr.bf16.mxu0 %v639
    %681 = vmatpush1.bf16.msra.mxu0 %v638
    %682 = vmatprep.subr.bf16.mxu0 %v642
    %683 = vmatpush1.bf16.msra.mxu0 %v641
    %684 = vmatprep.subr.bf16.mxu0 0
    %685 = vmatpush1.bf16.msra.mxu0 0
    %686 = vmatprep.subr.bf16.mxu0 0
    %687 = vmatpush1.bf16.msra.mxu0 0
    %688 = vmatprep.subr.bf16.mxu0 0
    %689 = vmatpush1.bf16.msra.mxu0 0
    %690 = vmatprep.subr.bf16.mxu0 0
    %691 = vmatpush1.bf16.msra.mxu0 0
    %692 = vmatprep.subr.bf16.mxu0 0
    %693 = vmatpush1.bf16.msra.mxu0 0
    %694 = vmatprep.subr.bf16.mxu0 0
    %695 = vmatpush1.bf16.msra.mxu0 0
    %696 = vmatprep.subr.bf16.mxu0 0
    %697 = vmatpush1.bf16.msra.mxu0 0
    %698 = vmatprep.subr.bf16.mxu0 0
    %699 = vmatpush1.bf16.msra.mxu0 0
    %700 = vmatprep.mubr.bf16.mxu0 0
    %701 = vmatmul.mubr.bf16.gmra.mrb[0].mxu0 %v507
    %v702 = vpop.f32.mrb[0].mxu0
    %v703 = vadd.f32 0.0, %v702
    %v704 = vpop.f32.mrb[0].mxu0
    %v705 = vadd.f32 0.0, %v704
    %v706 = vpop.f32.mrb[0].mxu0
    %v707 = vpop.f32.mrb[0].mxu0
    %708 = vdwg.mxu0
    %709 = vmatprep.subr.bf16.mxu0 0
    %710 = vmatpush1.bf16.msra.mxu0 %v622
    %711 = vmatprep.subr.bf16.mxu0 0
    %712 = vmatpush1.bf16.msra.mxu0 %v625
    %713 = vmatprep.subr.bf16.mxu0 0
    %714 = vmatpush1.bf16.msra.mxu0 %v628
    %715 = vmatprep.subr.bf16.mxu0 0
    %716 = vmatpush1.bf16.msra.mxu0 %v631
    %717 = vmatprep.subr.bf16.mxu0 0
    %718 = vmatpush1.bf16.msra.mxu0 %v634
    %719 = vmatprep.subr.bf16.mxu0 0
    %720 = vmatpush1.bf16.msra.mxu0 %v637
    %721 = vmatprep.subr.bf16.mxu0 0
    %722 = vmatpush1.bf16.msra.mxu0 %v640
    %723 = vmatprep.subr.bf16.mxu0 0
    %724 = vmatpush1.bf16.msra.mxu0 %v643
    %725 = vmatprep.subr.bf16.mxu0 0
    %726 = vmatpush1.bf16.msra.mxu0 0
    %727 = vmatprep.subr.bf16.mxu0 0
    %728 = vmatpush1.bf16.msra.mxu0 0
    %729 = vmatprep.subr.bf16.mxu0 0
    %730 = vmatpush1.bf16.msra.mxu0 0
    %731 = vmatprep.subr.bf16.mxu0 0
    %732 = vmatpush1.bf16.msra.mxu0 0
    %733 = vmatprep.subr.bf16.mxu0 0
    %734 = vmatpush1.bf16.msra.mxu0 0
    %735 = vmatprep.subr.bf16.mxu0 0
    %736 = vmatpush1.bf16.msra.mxu0 0
    %737 = vmatprep.subr.bf16.mxu0 0
    %738 = vmatpush1.bf16.msra.mxu0 0
    %739 = vmatprep.subr.bf16.mxu0 0
    %740 = vmatpush1.bf16.msra.mxu0 0
    %741 = vmatprep.mubr.bf16.mxu0 0
    %742 = vmatmul.mubr.bf16.gmra.mrb[0].mxu0 %v507
    %v743 = vpop.f32.mrb[0].mxu0
    %v744 = vadd.f32 0.0, %v743
    %v745 = vpop.f32.mrb[0].mxu0
    %v746 = vpop.f32.mrb[0].mxu0
    %v747 = vpop.f32.mrb[0].mxu0
    %748 = vdwg.mxu0
    %v749 = vadd.f32 %v504, %v703
    %v750 = vxor.u32 %v749, 2147483648
    %v751 = vmul.f32 %v750, 1.442695
    %v752 = vpow.pop %v751
    %v753 = vadd.f32 %v752, 1.0
    %v754 = vrcp.pop %v753
    %v755 = vmul.f32 1.0, %v754
    %v756 = vadd.f32 %v505, %v705
    %v757 = vxor.u32 %v756, 2147483648
    %v758 = vmul.f32 %v757, 1.442695
    %v759 = vpow.pop %v758
    %v760 = vadd.f32 %v759, 1.0
    %v761 = vrcp.pop %v760
    %v762 = vmul.f32 1.0, %v761
    %v763 = vadd.f32 %v744, %v499
    %v764 = vmul.f32 %v755, %v763
    %v765 = vadd.f32 %v506, %v764
    %v766 = vtanh.pop %v765
    %v767 = vsub.f32 1.0, %v762
    %v768 = vmul.f32 %v767, %v766
    %v769 = vmul.f32 %v762, %v500
    %v770 = vadd.f32 %v768, %v769
    %771 = vst [vmem:[#allocation12] sm:$0xff] %v770
    %s772 = smul.u32 1, 3
    %s773 = smul.addr %s772, 8
    %s774 = scalar_lea.vmem [#allocation2], %s773
    %v775 = vld [vmem:[%s774] sm:$0xff]
    %v776 = vld [vmem:[%s774 + $0x8] sm:$0xff]
    %v777 = vld [vmem:[%s774 + $0x10] sm:$0xff]
    %v778 = vpack.c.bf16 %v770, %v770
    %v779 = vld [vmem:[#allocation10] sm:$0xff]
    %v780 = vld [vmem:[#allocation10 + $0x8] sm:$0xf]
    %v781 = vld [vmem:[#allocation10 + $0xc] sm:$0xff]
    %v782 = vld [vmem:[#allocation10 + $0x14] sm:$0xf]
    %v783 = vld [vmem:[#allocation10 + $0x18] sm:$0xff]
    %v784 = vld [vmem:[#allocation10 + $0x20] sm:$0xf]
    %v785 = vld [vmem:[#allocation10 + $0x24] sm:$0xff]
    %v786 = vld [vmem:[#allocation10 + $0x2c] sm:$0xf]
    %v787 = vld [vmem:[#allocation10 + $0x30] sm:$0xff]
    %v788 = vld [vmem:[#allocation10 + $0x38] sm:$0xf]
    %v789 = vld [vmem:[#allocation10 + $0x3c] sm:$0xff]
    %v790 = vld [vmem:[#allocation10 + $0x44] sm:$0xf]
    %v791 = vld [vmem:[#allocation10 + $0x48] sm:$0xff]
    %v792 = vld [vmem:[#allocation10 + $0x50] sm:$0xf]
    %v793 = vld [vmem:[#allocation10 + $0x54] sm:$0xff]
    %v794 = vld [vmem:[#allocation10 + $0x5c] sm:$0xf]
    %v795 = vld [vmem:[#allocation10 + $0x60] sm:$0xff]
    %v796 = vld [vmem:[#allocation10 + $0x68] sm:$0xf]
    %v797 = vld [vmem:[#allocation10 + $0x6c] sm:$0xff]
    %v798 = vld [vmem:[#allocation10 + $0x74] sm:$0xf]
    %v799 = vld [vmem:[#allocation10 + $0x78] sm:$0xff]
    %v800 = vld [vmem:[#allocation10 + $0x80] sm:$0xf]
    %v801 = vld [vmem:[#allocation10 + $0x84] sm:$0xff]
    %v802 = vld [vmem:[#allocation10 + $0x8c] sm:$0xf]
    %v803 = vld [vmem:[#allocation10 + $0x90] sm:$0xff]
    %v804 = vld [vmem:[#allocation10 + $0x98] sm:$0xf]
    %v805 = vld [vmem:[#allocation10 + $0x9c] sm:$0xff]
    %v806 = vld [vmem:[#allocation10 + $0xa4] sm:$0xf]
    %v807 = vld [vmem:[#allocation10 + $0xa8] sm:$0xff]
    %v808 = vld [vmem:[#allocation10 + $0xb0] sm:$0xf]
    %v809 = vld [vmem:[#allocation10 + $0xb4] sm:$0xff]
    %v810 = vld [vmem:[#allocation10 + $0xbc] sm:$0xf]
    %v843 = vunpack.c.l.b16 %v779
    %v844 = vunpack.c.h.b16 %v779
    %v845 = vunpack.c.l.b16 %v780
    %v846 = vunpack.c.l.b16 %v781
    %v847 = vunpack.c.h.b16 %v781
    %v848 = vunpack.c.l.b16 %v782
    %v849 = vunpack.c.l.b16 %v783
    %v850 = vunpack.c.h.b16 %v783
    %v851 = vunpack.c.l.b16 %v784
    %v852 = vunpack.c.l.b16 %v785
    %v853 = vunpack.c.h.b16 %v785
    %v854 = vunpack.c.l.b16 %v786
    %v855 = vunpack.c.l.b16 %v787
    %v856 = vunpack.c.h.b16 %v787
    %v857 = vunpack.c.l.b16 %v788
    %v858 = vunpack.c.l.b16 %v789
    %v859 = vunpack.c.h.b16 %v789
    %v860 = vunpack.c.l.b16 %v790
    %v861 = vunpack.c.l.b16 %v791
    %v862 = vunpack.c.h.b16 %v791
    %v863 = vunpack.c.l.b16 %v792
    %v864 = vunpack.c.l.b16 %v793
    %v865 = vunpack.c.h.b16 %v793
    %v866 = vunpack.c.l.b16 %v794
    %v867 = vunpack.c.l.b16 %v795
    %v868 = vunpack.c.h.b16 %v795
    %v869 = vunpack.c.l.b16 %v796
    %v870 = vunpack.c.l.b16 %v797
    %v871 = vunpack.c.h.b16 %v797
    %v872 = vunpack.c.l.b16 %v798
    %v873 = vunpack.c.l.b16 %v799
    %v874 = vunpack.c.h.b16 %v799
    %v875 = vunpack.c.l.b16 %v800
    %v876 = vunpack.c.l.b16 %v801
    %v877 = vunpack.c.h.b16 %v801
    %v878 = vunpack.c.l.b16 %v802
    %v879 = vunpack.c.l.b16 %v803
    %v880 = vunpack.c.h.b16 %v803
    %v881 = vunpack.c.l.b16 %v804
    %v882 = vunpack.c.l.b16 %v805
    %v883 = vunpack.c.h.b16 %v805
    %v884 = vunpack.c.l.b16 %v806
    %v885 = vunpack.c.l.b16 %v807
    %v886 = vunpack.c.h.b16 %v807
    %v887 = vunpack.c.l.b16 %v808
    %v888 = vunpack.c.l.b16 %v809
    %v889 = vunpack.c.h.b16 %v809
    %v890 = vunpack.c.l.b16 %v810
    %v891 = vpack.c.b16 %v846, %v843
    %v892 = vpack.c.b16 %v847, %v844
    %v893 = vpack.c.b16 %v848, %v845
    %v894 = vpack.c.b16 %v852, %v849
    %v895 = vpack.c.b16 %v853, %v850
    %v896 = vpack.c.b16 %v854, %v851
    %v897 = vpack.c.b16 %v858, %v855
    %v898 = vpack.c.b16 %v859, %v856
    %v899 = vpack.c.b16 %v860, %v857
    %v900 = vpack.c.b16 %v864, %v861
    %v901 = vpack.c.b16 %v865, %v862
    %v902 = vpack.c.b16 %v866, %v863
    %v903 = vpack.c.b16 %v870, %v867
    %v904 = vpack.c.b16 %v871, %v868
    %v905 = vpack.c.b16 %v872, %v869
    %v906 = vpack.c.b16 %v876, %v873
    %v907 = vpack.c.b16 %v877, %v874
    %v908 = vpack.c.b16 %v878, %v875
    %v909 = vpack.c.b16 %v882, %v879
    %v910 = vpack.c.b16 %v883, %v880
    %v911 = vpack.c.b16 %v884, %v881
    %v912 = vpack.c.b16 %v888, %v885
    %v913 = vpack.c.b16 %v889, %v886
    %v914 = vpack.c.b16 %v890, %v887
    %939 = vmatprep.subr.bf16.mxu0 %v892
    %940 = vmatpush1.bf16.msra.mxu0 %v891
    %941 = vmatprep.subr.bf16.mxu0 %v895
    %942 = vmatpush1.bf16.msra.mxu0 %v894
    %943 = vmatprep.subr.bf16.mxu0 %v898
    %944 = vmatpush1.bf16.msra.mxu0 %v897
    %945 = vmatprep.subr.bf16.mxu0 %v901
    %946 = vmatpush1.bf16.msra.mxu0 %v900
    %947 = vmatprep.subr.bf16.mxu0 %v904
    %948 = vmatpush1.bf16.msra.mxu0 %v903
    %949 = vmatprep.subr.bf16.mxu0 %v907
    %950 = vmatpush1.bf16.msra.mxu0 %v906
    %951 = vmatprep.subr.bf16.mxu0 %v910
    %952 = vmatpush1.bf16.msra.mxu0 %v909
    %953 = vmatprep.subr.bf16.mxu0 %v913
    %954 = vmatpush1.bf16.msra.mxu0 %v912
    %955 = vmatprep.subr.bf16.mxu0 0
    %956 = vmatpush1.bf16.msra.mxu0 0
    %957 = vmatprep.subr.bf16.mxu0 0
    %958 = vmatpush1.bf16.msra.mxu0 0
    %959 = vmatprep.subr.bf16.mxu0 0
    %960 = vmatpush1.bf16.msra.mxu0 0
    %961 = vmatprep.subr.bf16.mxu0 0
    %962 = vmatpush1.bf16.msra.mxu0 0
    %963 = vmatprep.subr.bf16.mxu0 0
    %964 = vmatpush1.bf16.msra.mxu0 0
    %965 = vmatprep.subr.bf16.mxu0 0
    %966 = vmatpush1.bf16.msra.mxu0 0
    %967 = vmatprep.subr.bf16.mxu0 0
    %968 = vmatpush1.bf16.msra.mxu0 0
    %969 = vmatprep.subr.bf16.mxu0 0
    %970 = vmatpush1.bf16.msra.mxu0 0
    %971 = vmatprep.mubr.bf16.mxu0 0
    %972 = vmatmul.mubr.bf16.gmra.mrb[0].mxu0 %v778
    %v973 = vpop.f32.mrb[0].mxu0
    %v974 = vadd.f32 0.0, %v973
    %v975 = vpop.f32.mrb[0].mxu0
    %v976 = vadd.f32 0.0, %v975
    %v977 = vpop.f32.mrb[0].mxu0
    %v978 = vpop.f32.mrb[0].mxu0
    %979 = vdwg.mxu0
    %980 = vmatprep.subr.bf16.mxu0 0
    %981 = vmatpush1.bf16.msra.mxu0 %v893
    %982 = vmatprep.subr.bf16.mxu0 0
    %983 = vmatpush1.bf16.msra.mxu0 %v896
    %984 = vmatprep.subr.bf16.mxu0 0
    %985 = vmatpush1.bf16.msra.mxu0 %v899
    %986 = vmatprep.subr.bf16.mxu0 0
    %987 = vmatpush1.bf16.msra.mxu0 %v902
    %988 = vmatprep.subr.bf16.mxu0 0
    %989 = vmatpush1.bf16.msra.mxu0 %v905
    %990 = vmatprep.subr.bf16.mxu0 0
    %991 = vmatpush1.bf16.msra.mxu0 %v908
    %992 = vmatprep.subr.bf16.mxu0 0
    %993 = vmatpush1.bf16.msra.mxu0 %v911
    %994 = vmatprep.subr.bf16.mxu0 0
    %995 = vmatpush1.bf16.msra.mxu0 %v914
    %996 = vmatprep.subr.bf16.mxu0 0
    %997 = vmatpush1.bf16.msra.mxu0 0
    %998 = vmatprep.subr.bf16.mxu0 0
    %999 = vmatpush1.bf16.msra.mxu0 0
    %1000 = vmatprep.subr.bf16.mxu0 0
    %1001 = vmatpush1.bf16.msra.mxu0 0
    %1002 = vmatprep.subr.bf16.mxu0 0
    %1003 = vmatpush1.bf16.msra.mxu0 0
    %1004 = vmatprep.subr.bf16.mxu0 0
    %1005 = vmatpush1.bf16.msra.mxu0 0
    %1006 = vmatprep.subr.bf16.mxu0 0
    %1007 = vmatpush1.bf16.msra.mxu0 0
    %1008 = vmatprep.subr.bf16.mxu0 0
    %1009 = vmatpush1.bf16.msra.mxu0 0
    %1010 = vmatprep.subr.bf16.mxu0 0
    %1011 = vmatpush1.bf16.msra.mxu0 0
    %1012 = vmatprep.mubr.bf16.mxu0 0
    %1013 = vmatmul.mubr.bf16.gmra.mrb[0].mxu0 %v778
    %v1014 = vpop.f32.mrb[0].mxu0
    %v1015 = vadd.f32 0.0, %v1014
    %v1016 = vpop.f32.mrb[0].mxu0
    %v1017 = vpop.f32.mrb[0].mxu0
    %v1018 = vpop.f32.mrb[0].mxu0
    %1019 = vdwg.mxu0
    %v1020 = vadd.f32 %v775, %v974
    %v1021 = vxor.u32 %v1020, 2147483648
    %v1022 = vmul.f32 %v1021, 1.442695
    %v1023 = vpow.pop %v1022
    %v1024 = vadd.f32 %v1023, 1.0
    %v1025 = vrcp.pop %v1024
    %v1026 = vmul.f32 1.0, %v1025
    %v1027 = vadd.f32 %v776, %v976
    %v1028 = vxor.u32 %v1027, 2147483648
    %v1029 = vmul.f32 %v1028, 1.442695
    %v1030 = vpow.pop %v1029
    %v1031 = vadd.f32 %v1030, 1.0
    %v1032 = vrcp.pop %v1031
    %v1033 = vmul.f32 1.0, %v1032
    %v1034 = vadd.f32 %v1015, %v499
    %v1035 = vmul.f32 %v1026, %v1034
    %v1036 = vadd.f32 %v777, %v1035
    %v1037 = vtanh.pop %v1036
    %v1038 = vsub.f32 1.0, %v1033
    %v1039 = vmul.f32 %v1038, %v1037
    %v1040 = vmul.f32 %v1033, %v770
    %v1041 = vadd.f32 %v1039, %v1040
    %s1042 = scalar_lea.vmem [#allocation12], 8
    %1043 = vst [vmem:[%s1042] sm:$0xff] %v1041
    %s1044 = smul.u32 2, 3
    %s1045 = smul.addr %s1044, 8
    %s1046 = scalar_lea.vmem [#allocation2], %s1045
    %v1047 = vld [vmem:[%s1046] sm:$0xff]
    %v1048 = vld [vmem:[%s1046 + $0x8] sm:$0xff]
    %v1049 = vld [vmem:[%s1046 + $0x10] sm:$0xff]
    %v1050 = vpack.c.bf16 %v1041, %v1041
    %v1051 = vld [vmem:[#allocation10] sm:$0xff]
    %v1052 = vld [vmem:[#allocation10 + $0x8] sm:$0xf]
    %v1053 = vld [vmem:[#allocation10 + $0xc] sm:$0xff]
    %v1054 = vld [vmem:[#allocation10 + $0x14] sm:$0xf]
    %v1055 = vld [vmem:[#allocation10 + $0x18] sm:$0xff]
    %v1056 = vld [vmem:[#allocation10 + $0x20] sm:$0xf]
    %v1057 = vld [vmem:[#allocation10 + $0x24] sm:$0xff]
    %v1058 = vld [vmem:[#allocation10 + $0x2c] sm:$0xf]
    %v1059 = vld [vmem:[#allocation10 + $0x30] sm:$0xff]
    %v1060 = vld [vmem:[#allocation10 + $0x38] sm:$0xf]
    %v1061 = vld [vmem:[#allocation10 + $0x3c] sm:$0xff]
    %v1062 = vld [vmem:[#allocation10 + $0x44] sm:$0xf]
    %v1063 = vld [vmem:[#allocation10 + $0x48] sm:$0xff]
    %v1064 = vld [vmem:[#allocation10 + $0x50] sm:$0xf]
    %v1065 = vld [vmem:[#allocation10 + $0x54] sm:$0xff]
    %v1066 = vld [vmem:[#allocation10 + $0x5c] sm:$0xf]
    %v1067 = vld [vmem:[#allocation10 + $0x60] sm:$0xff]
    %v1068 = vld [vmem:[#allocation10 + $0x68] sm:$0xf]
    %v1069 = vld [vmem:[#allocation10 + $0x6c] sm:$0xff]
    %v1070 = vld [vmem:[#allocation10 + $0x74] sm:$0xf]
    %v1071 = vld [vmem:[#allocation10 + $0x78] sm:$0xff]
    %v1072 = vld [vmem:[#allocation10 + $0x80] sm:$0xf]
    %v1073 = vld [vmem:[#allocation10 + $0x84] sm:$0xff]
    %v1074 = vld [vmem:[#allocation10 + $0x8c] sm:$0xf]
    %v1075 = vld [vmem:[#allocation10 + $0x90] sm:$0xff]
    %v1076 = vld [vmem:[#allocation10 + $0x98] sm:$0xf]
    %v1077 = vld [vmem:[#allocation10 + $0x9c] sm:$0xff]
    %v1078 = vld [vmem:[#allocation10 + $0xa4] sm:$0xf]
    %v1079 = vld [vmem:[#allocation10 + $0xa8] sm:$0xff]
    %v1080 = vld [vmem:[#allocation10 + $0xb0] sm:$0xf]
    %v1081 = vld [vmem:[#allocation10 + $0xb4] sm:$0xff]
    %v1082 = vld [vmem:[#allocation10 + $0xbc] sm:$0xf]
    %v1115 = vunpack.c.l.b16 %v1051
    %v1116 = vunpack.c.h.b16 %v1051
    %v1117 = vunpack.c.l.b16 %v1052
    %v1118 = vunpack.c.l.b16 %v1053
    %v1119 = vunpack.c.h.b16 %v1053
    %v1120 = vunpack.c.l.b16 %v1054
    %v1121 = vunpack.c.l.b16 %v1055
    %v1122 = vunpack.c.h.b16 %v1055
    %v1123 = vunpack.c.l.b16 %v1056
    %v1124 = vunpack.c.l.b16 %v1057
    %v1125 = vunpack.c.h.b16 %v1057
    %v1126 = vunpack.c.l.b16 %v1058
    %v1127 = vunpack.c.l.b16 %v1059
    %v1128 = vunpack.c.h.b16 %v1059
    %v1129 = vunpack.c.l.b16 %v1060
    %v1130 = vunpack.c.l.b16 %v1061
    %v1131 = vunpack.c.h.b16 %v1061
    %v1132 = vunpack.c.l.b16 %v1062
    %v1133 = vunpack.c.l.b16 %v1063
    %v1134 = vunpack.c.h.b16 %v1063
    %v1135 = vunpack.c.l.b16 %v1064
    %v1136 = vunpack.c.l.b16 %v1065
    %v1137 = vunpack.c.h.b16 %v1065
    %v1138 = vunpack.c.l.b16 %v1066
    %v1139 = vunpack.c.l.b16 %v1067
    %v1140 = vunpack.c.h.b16 %v1067
    %v1141 = vunpack.c.l.b16 %v1068
    %v1142 = vunpack.c.l.b16 %v1069
    %v1143 = vunpack.c.h.b16 %v1069
    %v1144 = vunpack.c.l.b16 %v1070
    %v1145 = vunpack.c.l.b16 %v1071
    %v1146 = vunpack.c.h.b16 %v1071
    %v1147 = vunpack.c.l.b16 %v1072
    %v1148 = vunpack.c.l.b16 %v1073
    %v1149 = vunpack.c.h.b16 %v1073
    %v1150 = vunpack.c.l.b16 %v1074
    %v1151 = vunpack.c.l.b16 %v1075
    %v1152 = vunpack.c.h.b16 %v1075
    %v1153 = vunpack.c.l.b16 %v1076
    %v1154 = vunpack.c.l.b16 %v1077
    %v1155 = vunpack.c.h.b16 %v1077
    %v1156 = vunpack.c.l.b16 %v1078
    %v1157 = vunpack.c.l.b16 %v1079
    %v1158 = vunpack.c.h.b16 %v1079
    %v1159 = vunpack.c.l.b16 %v1080
    %v1160 = vunpack.c.l.b16 %v1081
    %v1161 = vunpack.c.h.b16 %v1081
    %v1162 = vunpack.c.l.b16 %v1082
    %v1163 = vpack.c.b16 %v1118, %v1115
    %v1164 = vpack.c.b16 %v1119, %v1116
    %v1165 = vpack.c.b16 %v1120, %v1117
    %v1166 = vpack.c.b16 %v1124, %v1121
    %v1167 = vpack.c.b16 %v1125, %v1122
    %v1168 = vpack.c.b16 %v1126, %v1123
    %v1169 = vpack.c.b16 %v1130, %v1127
    %v1170 = vpack.c.b16 %v1131, %v1128
    %v1171 = vpack.c.b16 %v1132, %v1129
    %v1172 = vpack.c.b16 %v1136, %v1133
    %v1173 = vpack.c.b16 %v1137, %v1134
    %v1174 = vpack.c.b16 %v1138, %v1135
    %v1175 = vpack.c.b16 %v1142, %v1139
    %v1176 = vpack.c.b16 %v1143, %v1140
    %v1177 = vpack.c.b16 %v1144, %v1141
    %v1178 = vpack.c.b16 %v1148, %v1145
    %v1179 = vpack.c.b16 %v1149, %v1146
    %v1180 = vpack.c.b16 %v1150, %v1147
    %v1181 = vpack.c.b16 %v1154, %v1151
    %v1182 = vpack.c.b16 %v1155, %v1152
    %v1183 = vpack.c.b16 %v1156, %v1153
    %v1184 = vpack.c.b16 %v1160, %v1157
    %v1185 = vpack.c.b16 %v1161, %v1158
    %v1186 = vpack.c.b16 %v1162, %v1159
    %1211 = vmatprep.subr.bf16.mxu0 %v1164
    %1212 = vmatpush1.bf16.msra.mxu0 %v1163
    %1213 = vmatprep.subr.bf16.mxu0 %v1167
    %1214 = vmatpush1.bf16.msra.mxu0 %v1166
    %1215 = vmatprep.subr.bf16.mxu0 %v1170
    %1216 = vmatpush1.bf16.msra.mxu0 %v1169
    %1217 = vmatprep.subr.bf16.mxu0 %v1173
    %1218 = vmatpush1.bf16.msra.mxu0 %v1172
    %1219 = vmatprep.subr.bf16.mxu0 %v1176
    %1220 = vmatpush1.bf16.msra.mxu0 %v1175
    %1221 = vmatprep.subr.bf16.mxu0 %v1179
    %1222 = vmatpush1.bf16.msra.mxu0 %v1178
    %1223 = vmatprep.subr.bf16.mxu0 %v1182
    %1224 = vmatpush1.bf16.msra.mxu0 %v1181
    %1225 = vmatprep.subr.bf16.mxu0 %v1185
    %1226 = vmatpush1.bf16.msra.mxu0 %v1184
    %1227 = vmatprep.subr.bf16.mxu0 0
    %1228 = vmatpush1.bf16.msra.mxu0 0
    %1229 = vmatprep.subr.bf16.mxu0 0
    %1230 = vmatpush1.bf16.msra.mxu0 0
    %1231 = vmatprep.subr.bf16.mxu0 0
    %1232 = vmatpush1.bf16.msra.mxu0 0
    %1233 = vmatprep.subr.bf16.mxu0 0
    %1234 = vmatpush1.bf16.msra.mxu0 0
    %1235 = vmatprep.subr.bf16.mxu0 0
    %1236 = vmatpush1.bf16.msra.mxu0 0
    %1237 = vmatprep.subr.bf16.mxu0 0
    %1238 = vmatpush1.bf16.msra.mxu0 0
    %1239 = vmatprep.subr.bf16.mxu0 0
    %1240 = vmatpush1.bf16.msra.mxu0 0
    %1241 = vmatprep.subr.bf16.mxu0 0
    %1242 = vmatpush1.bf16.msra.mxu0 0
    %1243 = vmatprep.mubr.bf16.mxu0 0
    %1244 = vmatmul.mubr.bf16.gmra.mrb[0].mxu0 %v1050
    %v1245 = vpop.f32.mrb[0].mxu0
    %v1246 = vadd.f32 0.0, %v1245
    %v1247 = vpop.f32.mrb[0].mxu0
    %v1248 = vadd.f32 0.0, %v1247
    %v1249 = vpop.f32.mrb[0].mxu0
    %v1250 = vpop.f32.mrb[0].mxu0
    %1251 = vdwg.mxu0
    %1252 = vmatprep.subr.bf16.mxu0 0
    %1253 = vmatpush1.bf16.msra.mxu0 %v1165
    %1254 = vmatprep.subr.bf16.mxu0 0
    %1255 = vmatpush1.bf16.msra.mxu0 %v1168
    %1256 = vmatprep.subr.bf16.mxu0 0
    %1257 = vmatpush1.bf16.msra.mxu0 %v1171
    %1258 = vmatprep.subr.bf16.mxu0 0
    %1259 = vmatpush1.bf16.msra.mxu0 %v1174
    %1260 = vmatprep.subr.bf16.mxu0 0
    %1261 = vmatpush1.bf16.msra.mxu0 %v1177
    %1262 = vmatprep.subr.bf16.mxu0 0
    %1263 = vmatpush1.bf16.msra.mxu0 %v1180
    %1264 = vmatprep.subr.bf16.mxu0 0
    %1265 = vmatpush1.bf16.msra.mxu0 %v1183
    %1266 = vmatprep.subr.bf16.mxu0 0
    %1267 = vmatpush1.bf16.msra.mxu0 %v1186
    %1268 = vmatprep.subr.bf16.mxu0 0
    %1269 = vmatpush1.bf16.msra.mxu0 0
    %1270 = vmatprep.subr.bf16.mxu0 0
    %1271 = vmatpush1.bf16.msra.mxu0 0
    %1272 = vmatprep.subr.bf16.mxu0 0
    %1273 = vmatpush1.bf16.msra.mxu0 0
    %1274 = vmatprep.subr.bf16.mxu0 0
    %1275 = vmatpush1.bf16.msra.mxu0 0
    %1276 = vmatprep.subr.bf16.mxu0 0
    %1277 = vmatpush1.bf16.msra.mxu0 0
    %1278 = vmatprep.subr.bf16.mxu0 0
    %1279 = vmatpush1.bf16.msra.mxu0 0
    %1280 = vmatprep.subr.bf16.mxu0 0
    %1281 = vmatpush1.bf16.msra.mxu0 0
    %1282 = vmatprep.subr.bf16.mxu0 0
    %1283 = vmatpush1.bf16.msra.mxu0 0
    %1284 = vmatprep.mubr.bf16.mxu0 0
    %1285 = vmatmul.mubr.bf16.gmra.mrb[0].mxu0 %v1050
    %v1286 = vpop.f32.mrb[0].mxu0
    %v1287 = vadd.f32 0.0, %v1286
    %v1288 = vpop.f32.mrb[0].mxu0
    %v1289 = vpop.f32.mrb[0].mxu0
    %v1290 = vpop.f32.mrb[0].mxu0
    %1291 = vdwg.mxu0
    %v1292 = vadd.f32 %v1047, %v1246
    %v1293 = vxor.u32 %v1292, 2147483648
    %v1294 = vmul.f32 %v1293, 1.442695
    %v1295 = vpow.pop %v1294
    %v1296 = vadd.f32 %v1295, 1.0
    %v1297 = vrcp.pop %v1296
    %v1298 = vmul.f32 1.0, %v1297
    %v1299 = vadd.f32 %v1048, %v1248
    %v1300 = vxor.u32 %v1299, 2147483648
    %v1301 = vmul.f32 %v1300, 1.442695
    %v1302 = vpow.pop %v1301
    %v1303 = vadd.f32 %v1302, 1.0
    %v1304 = vrcp.pop %v1303
    %v1305 = vmul.f32 1.0, %v1304
    %v1306 = vadd.f32 %v1287, %v499
    %v1307 = vmul.f32 %v1298, %v1306
    %v1308 = vadd.f32 %v1049, %v1307
    %v1309 = vtanh.pop %v1308
    %v1310 = vsub.f32 1.0, %v1305
    %v1311 = vmul.f32 %v1310, %v1309
    %v1312 = vmul.f32 %v1305, %v1041
    %v1313 = vadd.f32 %v1311, %v1312
    %s1314 = scalar_lea.vmem [#allocation12], 16
    %1315 = vst [vmem:[%s1314] sm:$0xff] %v1313
    %s1316 = smul.u32 3, 3
    %s1317 = smul.addr %s1316, 8
    %s1318 = scalar_lea.vmem [#allocation2], %s1317
    %v1319 = vld [vmem:[%s1318] sm:$0xff]
    %v1320 = vld [vmem:[%s1318 + $0x8] sm:$0xff]
    %v1321 = vld [vmem:[%s1318 + $0x10] sm:$0xff]
    %v1322 = vpack.c.bf16 %v1313, %v1313
    %v1323 = vld [vmem:[#allocation10] sm:$0xff]
    %v1324 = vld [vmem:[#allocation10 + $0x8] sm:$0xf]
    %v1325 = vld [vmem:[#allocation10 + $0xc] sm:$0xff]
    %v1326 = vld [vmem:[#allocation10 + $0x14] sm:$0xf]
    %v1327 = vld [vmem:[#allocation10 + $0x18] sm:$0xff]
    %v1328 = vld [vmem:[#allocation10 + $0x20] sm:$0xf]
    %v1329 = vld [vmem:[#allocation10 + $0x24] sm:$0xff]
    %v1330 = vld [vmem:[#allocation10 + $0x2c] sm:$0xf]
    %v1331 = vld [vmem:[#allocation10 + $0x30] sm:$0xff]
    %v1332 = vld [vmem:[#allocation10 + $0x38] sm:$0xf]
    %v1333 = vld [vmem:[#allocation10 + $0x3c] sm:$0xff]
    %v1334 = vld [vmem:[#allocation10 + $0x44] sm:$0xf]
    %v1335 = vld [vmem:[#allocation10 + $0x48] sm:$0xff]
    %v1336 = vld [vmem:[#allocation10 + $0x50] sm:$0xf]
    %v1337 = vld [vmem:[#allocation10 + $0x54] sm:$0xff]
    %v1338 = vld [vmem:[#allocation10 + $0x5c] sm:$0xf]
    %v1339 = vld [vmem:[#allocation10 + $0x60] sm:$0xff]
    %v1340 = vld [vmem:[#allocation10 + $0x68] sm:$0xf]
    %v1341 = vld [vmem:[#allocation10 + $0x6c] sm:$0xff]
    %v1342 = vld [vmem:[#allocation10 + $0x74] sm:$0xf]
    %v1343 = vld [vmem:[#allocation10 + $0x78] sm:$0xff]
    %v1344 = vld [vmem:[#allocation10 + $0x80] sm:$0xf]
    %v1345 = vld [vmem:[#allocation10 + $0x84] sm:$0xff]
    %v1346 = vld [vmem:[#allocation10 + $0x8c] sm:$0xf]
    %v1347 = vld [vmem:[#allocation10 + $0x90] sm:$0xff]
    %v1348 = vld [vmem:[#allocation10 + $0x98] sm:$0xf]
    %v1349 = vld [vmem:[#allocation10 + $0x9c] sm:$0xff]
    %v1350 = vld [vmem:[#allocation10 + $0xa4] sm:$0xf]
    %v1351 = vld [vmem:[#allocation10 + $0xa8] sm:$0xff]
    %v1352 = vld [vmem:[#allocation10 + $0xb0] sm:$0xf]
    %v1353 = vld [vmem:[#allocation10 + $0xb4] sm:$0xff]
    %v1354 = vld [vmem:[#allocation10 + $0xbc] sm:$0xf]
    %v1387 = vunpack.c.l.b16 %v1323
    %v1388 = vunpack.c.h.b16 %v1323
    %v1389 = vunpack.c.l.b16 %v1324
    %v1390 = vunpack.c.l.b16 %v1325
    %v1391 = vunpack.c.h.b16 %v1325
    %v1392 = vunpack.c.l.b16 %v1326
    %v1393 = vunpack.c.l.b16 %v1327
    %v1394 = vunpack.c.h.b16 %v1327
    %v1395 = vunpack.c.l.b16 %v1328
    %v1396 = vunpack.c.l.b16 %v1329
    %v1397 = vunpack.c.h.b16 %v1329
    %v1398 = vunpack.c.l.b16 %v1330
    %v1399 = vunpack.c.l.b16 %v1331
    %v1400 = vunpack.c.h.b16 %v1331
    %v1401 = vunpack.c.l.b16 %v1332
    %v1402 = vunpack.c.l.b16 %v1333
    %v1403 = vunpack.c.h.b16 %v1333
    %v1404 = vunpack.c.l.b16 %v1334
    %v1405 = vunpack.c.l.b16 %v1335
    %v1406 = vunpack.c.h.b16 %v1335
    %v1407 = vunpack.c.l.b16 %v1336
    %v1408 = vunpack.c.l.b16 %v1337
    %v1409 = vunpack.c.h.b16 %v1337
    %v1410 = vunpack.c.l.b16 %v1338
    %v1411 = vunpack.c.l.b16 %v1339
    %v1412 = vunpack.c.h.b16 %v1339
    %v1413 = vunpack.c.l.b16 %v1340
    %v1414 = vunpack.c.l.b16 %v1341
    %v1415 = vunpack.c.h.b16 %v1341
    %v1416 = vunpack.c.l.b16 %v1342
    %v1417 = vunpack.c.l.b16 %v1343
    %v1418 = vunpack.c.h.b16 %v1343
    %v1419 = vunpack.c.l.b16 %v1344
    %v1420 = vunpack.c.l.b16 %v1345
    %v1421 = vunpack.c.h.b16 %v1345
    %v1422 = vunpack.c.l.b16 %v1346
    %v1423 = vunpack.c.l.b16 %v1347
    %v1424 = vunpack.c.h.b16 %v1347
    %v1425 = vunpack.c.l.b16 %v1348
    %v1426 = vunpack.c.l.b16 %v1349
    %v1427 = vunpack.c.h.b16 %v1349
    %v1428 = vunpack.c.l.b16 %v1350
    %v1429 = vunpack.c.l.b16 %v1351
    %v1430 = vunpack.c.h.b16 %v1351
    %v1431 = vunpack.c.l.b16 %v1352
    %v1432 = vunpack.c.l.b16 %v1353
    %v1433 = vunpack.c.h.b16 %v1353
    %v1434 = vunpack.c.l.b16 %v1354
    %v1435 = vpack.c.b16 %v1390, %v1387
    %v1436 = vpack.c.b16 %v1391, %v1388
    %v1437 = vpack.c.b16 %v1392, %v1389
    %v1438 = vpack.c.b16 %v1396, %v1393
    %v1439 = vpack.c.b16 %v1397, %v1394
    %v1440 = vpack.c.b16 %v1398, %v1395
    %v1441 = vpack.c.b16 %v1402, %v1399
    %v1442 = vpack.c.b16 %v1403, %v1400
    %v1443 = vpack.c.b16 %v1404, %v1401
    %v1444 = vpack.c.b16 %v1408, %v1405
    %v1445 = vpack.c.b16 %v1409, %v1406
    %v1446 = vpack.c.b16 %v1410, %v1407
    %v1447 = vpack.c.b16 %v1414, %v1411
    %v1448 = vpack.c.b16 %v1415, %v1412
    %v1449 = vpack.c.b16 %v1416, %v1413
    %v1450 = vpack.c.b16 %v1420, %v1417
    %v1451 = vpack.c.b16 %v1421, %v1418
    %v1452 = vpack.c.b16 %v1422, %v1419
    %v1453 = vpack.c.b16 %v1426, %v1423
    %v1454 = vpack.c.b16 %v1427, %v1424
    %v1455 = vpack.c.b16 %v1428, %v1425
    %v1456 = vpack.c.b16 %v1432, %v1429
    %v1457 = vpack.c.b16 %v1433, %v1430
    %v1458 = vpack.c.b16 %v1434, %v1431
    %1483 = vmatprep.subr.bf16.mxu0 %v1436
    %1484 = vmatpush1.bf16.msra.mxu0 %v1435
    %1485 = vmatprep.subr.bf16.mxu0 %v1439
    %1486 = vmatpush1.bf16.msra.mxu0 %v1438
    %1487 = vmatprep.subr.bf16.mxu0 %v1442
    %1488 = vmatpush1.bf16.msra.mxu0 %v1441
    %1489 = vmatprep.subr.bf16.mxu0 %v1445
    %1490 = vmatpush1.bf16.msra.mxu0 %v1444
    %1491 = vmatprep.subr.bf16.mxu0 %v1448
    %1492 = vmatpush1.bf16.msra.mxu0 %v1447
    %1493 = vmatprep.subr.bf16.mxu0 %v1451
    %1494 = vmatpush1.bf16.msra.mxu0 %v1450
    %1495 = vmatprep.subr.bf16.mxu0 %v1454
    %1496 = vmatpush1.bf16.msra.mxu0 %v1453
    %1497 = vmatprep.subr.bf16.mxu0 %v1457
    %1498 = vmatpush1.bf16.msra.mxu0 %v1456
    %1499 = vmatprep.subr.bf16.mxu0 0
    %1500 = vmatpush1.bf16.msra.mxu0 0
    %1501 = vmatprep.subr.bf16.mxu0 0
    %1502 = vmatpush1.bf16.msra.mxu0 0
    %1503 = vmatprep.subr.bf16.mxu0 0
    %1504 = vmatpush1.bf16.msra.mxu0 0
    %1505 = vmatprep.subr.bf16.mxu0 0
    %1506 = vmatpush1.bf16.msra.mxu0 0
    %1507 = vmatprep.subr.bf16.mxu0 0
    %1508 = vmatpush1.bf16.msra.mxu0 0
    %1509 = vmatprep.subr.bf16.mxu0 0
    %1510 = vmatpush1.bf16.msra.mxu0 0
    %1511 = vmatprep.subr.bf16.mxu0 0
    %1512 = vmatpush1.bf16.msra.mxu0 0
    %1513 = vmatprep.subr.bf16.mxu0 0
    %1514 = vmatpush1.bf16.msra.mxu0 0
    %1515 = vmatprep.mubr.bf16.mxu0 0
    %1516 = vmatmul.mubr.bf16.gmra.mrb[0].mxu0 %v1322
    %v1517 = vpop.f32.mrb[0].mxu0
    %v1518 = vadd.f32 0.0, %v1517
    %v1519 = vpop.f32.mrb[0].mxu0
    %v1520 = vadd.f32 0.0, %v1519
    %v1521 = vpop.f32.mrb[0].mxu0
    %v1522 = vpop.f32.mrb[0].mxu0
    %1523 = vdwg.mxu0
    %1524 = vmatprep.subr.bf16.mxu0 0
    %1525 = vmatpush1.bf16.msra.mxu0 %v1437
    %1526 = vmatprep.subr.bf16.mxu0 0
    %1527 = vmatpush1.bf16.msra.mxu0 %v1440
    %1528 = vmatprep.subr.bf16.mxu0 0
    %1529 = vmatpush1.bf16.msra.mxu0 %v1443
    %1530 = vmatprep.subr.bf16.mxu0 0
    %1531 = vmatpush1.bf16.msra.mxu0 %v1446
    %1532 = vmatprep.subr.bf16.mxu0 0
    %1533 = vmatpush1.bf16.msra.mxu0 %v1449
    %1534 = vmatprep.subr.bf16.mxu0 0
    %1535 = vmatpush1.bf16.msra.mxu0 %v1452
    %1536 = vmatprep.subr.bf16.mxu0 0
    %1537 = vmatpush1.bf16.msra.mxu0 %v1455
    %1538 = vmatprep.subr.bf16.mxu0 0
    %1539 = vmatpush1.bf16.msra.mxu0 %v1458
    %1540 = vmatprep.subr.bf16.mxu0 0
    %1541 = vmatpush1.bf16.msra.mxu0 0
    %1542 = vmatprep.subr.bf16.mxu0 0
    %1543 = vmatpush1.bf16.msra.mxu0 0
    %1544 = vmatprep.subr.bf16.mxu0 0
    %1545 = vmatpush1.bf16.msra.mxu0 0
    %1546 = vmatprep.subr.bf16.mxu0 0
    %1547 = vmatpush1.bf16.msra.mxu0 0
    %1548 = vmatprep.subr.bf16.mxu0 0
    %1549 = vmatpush1.bf16.msra.mxu0 0
    %1550 = vmatprep.subr.bf16.mxu0 0
    %1551 = vmatpush1.bf16.msra.mxu0 0
    %1552 = vmatprep.subr.bf16.mxu0 0
    %1553 = vmatpush1.bf16.msra.mxu0 0
    %1554 = vmatprep.subr.bf16.mxu0 0
    %1555 = vmatpush1.bf16.msra.mxu0 0
    %1556 = vmatprep.mubr.bf16.mxu0 0
    %1557 = vmatmul.mubr.bf16.gmra.mrb[0].mxu0 %v1322
    %v1558 = vpop.f32.mrb[0].mxu0
    %v1559 = vadd.f32 0.0, %v1558
    %v1560 = vpop.f32.mrb[0].mxu0
    %v1561 = vpop.f32.mrb[0].mxu0
    %v1562 = vpop.f32.mrb[0].mxu0
    %1563 = vdwg.mxu0
    %v1564 = vadd.f32 %v1319, %v1518
    %v1565 = vxor.u32 %v1564, 2147483648
    %v1566 = vmul.f32 %v1565, 1.442695
    %v1567 = vpow.pop %v1566
    %v1568 = vadd.f32 %v1567, 1.0
    %v1569 = vrcp.pop %v1568
    %v1570 = vmul.f32 1.0, %v1569
    %v1571 = vadd.f32 %v1320, %v1520
    %v1572 = vxor.u32 %v1571, 2147483648
    %v1573 = vmul.f32 %v1572, 1.442695
    %v1574 = vpow.pop %v1573
    %v1575 = vadd.f32 %v1574, 1.0
    %v1576 = vrcp.pop %v1575
    %v1577 = vmul.f32 1.0, %v1576
    %v1578 = vadd.f32 %v1559, %v499
    %v1579 = vmul.f32 %v1570, %v1578
    %v1580 = vadd.f32 %v1321, %v1579
    %v1581 = vtanh.pop %v1580
    %v1582 = vsub.f32 1.0, %v1577
    %v1583 = vmul.f32 %v1582, %v1581
    %v1584 = vmul.f32 %v1577, %v1313
    %v1585 = vadd.f32 %v1583, %v1584
    %s1586 = scalar_lea.vmem [#allocation12], 24
    %1587 = vst [vmem:[%s1586] sm:$0xff] %v1585
    %s1588 = smul.u32 4, 3
    %s1589 = smul.addr %s1588, 8
    %s1590 = scalar_lea.vmem [#allocation2], %s1589
    %v1591 = vld [vmem:[%s1590] sm:$0xff]
    %v1592 = vld [vmem:[%s1590 + $0x8] sm:$0xff]
    %v1593 = vld [vmem:[%s1590 + $0x10] sm:$0xff]
    %v1594 = vpack.c.bf16 %v1585, %v1585
    %v1595 = vld [vmem:[#allocation10] sm:$0xff]
    %v1596 = vld [vmem:[#allocation10 + $0x8] sm:$0xf]
    %v1597 = vld [vmem:[#allocation10 + $0xc] sm:$0xff]
    %v1598 = vld [vmem:[#allocation10 + $0x14] sm:$0xf]
    %v1599 = vld [vmem:[#allocation10 + $0x18] sm:$0xff]
    %v1600 = vld [vmem:[#allocation10 + $0x20] sm:$0xf]
    %v1601 = vld [vmem:[#allocation10 + $0x24] sm:$0xff]
    %v1602 = vld [vmem:[#allocation10 + $0x2c] sm:$0xf]
    %v1603 = vld [vmem:[#allocation10 + $0x30] sm:$0xff]
    %v1604 = vld [vmem:[#allocation10 + $0x38] sm:$0xf]
    %v1605 = vld [vmem:[#allocation10 + $0x3c] sm:$0xff]
    %v1606 = vld [vmem:[#allocation10 + $0x44] sm:$0xf]
    %v1607 = vld [vmem:[#allocation10 + $0x48] sm:$0xff]
    %v1608 = vld [vmem:[#allocation10 + $0x50] sm:$0xf]
    %v1609 = vld [vmem:[#allocation10 + $0x54] sm:$0xff]
    %v1610 = vld [vmem:[#allocation10 + $0x5c] sm:$0xf]
    %v1611 = vld [vmem:[#allocation10 + $0x60] sm:$0xff]
    %v1612 = vld [vmem:[#allocation10 + $0x68] sm:$0xf]
    %v1613 = vld [vmem:[#allocation10 + $0x6c] sm:$0xff]
    %v1614 = vld [vmem:[#allocation10 + $0x74] sm:$0xf]
    %v1615 = vld [vmem:[#allocation10 + $0x78] sm:$0xff]
    %v1616 = vld [vmem:[#allocation10 + $0x80] sm:$0xf]
    %v1617 = vld [vmem:[#allocation10 + $0x84] sm:$0xff]
    %v1618 = vld [vmem:[#allocation10 + $0x8c] sm:$0xf]
    %v1619 = vld [vmem:[#allocation10 + $0x90] sm:$0xff]
    %v1620 = vld [vmem:[#allocation10 + $0x98] sm:$0xf]
    %v1621 = vld [vmem:[#allocation10 + $0x9c] sm:$0xff]
    %v1622 = vld [vmem:[#allocation10 + $0xa4] sm:$0xf]
    %v1623 = vld [vmem:[#allocation10 + $0xa8] sm:$0xff]
    %v1624 = vld [vmem:[#allocation10 + $0xb0] sm:$0xf]
    %v1625 = vld [vmem:[#allocation10 + $0xb4] sm:$0xff]
    %v1626 = vld [vmem:[#allocation10 + $0xbc] sm:$0xf]
    %v1659 = vunpack.c.l.b16 %v1595
    %v1660 = vunpack.c.h.b16 %v1595
    %v1661 = vunpack.c.l.b16 %v1596
    %v1662 = vunpack.c.l.b16 %v1597
    %v1663 = vunpack.c.h.b16 %v1597
    %v1664 = vunpack.c.l.b16 %v1598
    %v1665 = vunpack.c.l.b16 %v1599
    %v1666 = vunpack.c.h.b16 %v1599
    %v1667 = vunpack.c.l.b16 %v1600
    %v1668 = vunpack.c.l.b16 %v1601
    %v1669 = vunpack.c.h.b16 %v1601
    %v1670 = vunpack.c.l.b16 %v1602
    %v1671 = vunpack.c.l.b16 %v1603
    %v1672 = vunpack.c.h.b16 %v1603
    %v1673 = vunpack.c.l.b16 %v1604
    %v1674 = vunpack.c.l.b16 %v1605
    %v1675 = vunpack.c.h.b16 %v1605
    %v1676 = vunpack.c.l.b16 %v1606
    %v1677 = vunpack.c.l.b16 %v1607
    %v1678 = vunpack.c.h.b16 %v1607
    %v1679 = vunpack.c.l.b16 %v1608
    %v1680 = vunpack.c.l.b16 %v1609
    %v1681 = vunpack.c.h.b16 %v1609
    %v1682 = vunpack.c.l.b16 %v1610
    %v1683 = vunpack.c.l.b16 %v1611
    %v1684 = vunpack.c.h.b16 %v1611
    %v1685 = vunpack.c.l.b16 %v1612
    %v1686 = vunpack.c.l.b16 %v1613
    %v1687 = vunpack.c.h.b16 %v1613
    %v1688 = vunpack.c.l.b16 %v1614
    %v1689 = vunpack.c.l.b16 %v1615
    %v1690 = vunpack.c.h.b16 %v1615
    %v1691 = vunpack.c.l.b16 %v1616
    %v1692 = vunpack.c.l.b16 %v1617
    %v1693 = vunpack.c.h.b16 %v1617
    %v1694 = vunpack.c.l.b16 %v1618
    %v1695 = vunpack.c.l.b16 %v1619
    %v1696 = vunpack.c.h.b16 %v1619
    %v1697 = vunpack.c.l.b16 %v1620
    %v1698 = vunpack.c.l.b16 %v1621
    %v1699 = vunpack.c.h.b16 %v1621
    %v1700 = vunpack.c.l.b16 %v1622
    %v1701 = vunpack.c.l.b16 %v1623
    %v1702 = vunpack.c.h.b16 %v1623
    %v1703 = vunpack.c.l.b16 %v1624
    %v1704 = vunpack.c.l.b16 %v1625
    %v1705 = vunpack.c.h.b16 %v1625
    %v1706 = vunpack.c.l.b16 %v1626
    %v1707 = vpack.c.b16 %v1662, %v1659
    %v1708 = vpack.c.b16 %v1663, %v1660
    %v1709 = vpack.c.b16 %v1664, %v1661
    %v1710 = vpack.c.b16 %v1668, %v1665
    %v1711 = vpack.c.b16 %v1669, %v1666
    %v1712 = vpack.c.b16 %v1670, %v1667
    %v1713 = vpack.c.b16 %v1674, %v1671
    %v1714 = vpack.c.b16 %v1675, %v1672
    %v1715 = vpack.c.b16 %v1676, %v1673
    %v1716 = vpack.c.b16 %v1680, %v1677
    %v1717 = vpack.c.b16 %v1681, %v1678
    %v1718 = vpack.c.b16 %v1682, %v1679
    %v1719 = vpack.c.b16 %v1686, %v1683
    %v1720 = vpack.c.b16 %v1687, %v1684
    %v1721 = vpack.c.b16 %v1688, %v1685
    %v1722 = vpack.c.b16 %v1692, %v1689
    %v1723 = vpack.c.b16 %v1693, %v1690
    %v1724 = vpack.c.b16 %v1694, %v1691
    %v1725 = vpack.c.b16 %v1698, %v1695
    %v1726 = vpack.c.b16 %v1699, %v1696
    %v1727 = vpack.c.b16 %v1700, %v1697
    %v1728 = vpack.c.b16 %v1704, %v1701
    %v1729 = vpack.c.b16 %v1705, %v1702
    %v1730 = vpack.c.b16 %v1706, %v1703
    %1755 = vmatprep.subr.bf16.mxu0 %v1708
    %1756 = vmatpush1.bf16.msra.mxu0 %v1707
    %1757 = vmatprep.subr.bf16.mxu0 %v1711
    %1758 = vmatpush1.bf16.msra.mxu0 %v1710
    %1759 = vmatprep.subr.bf16.mxu0 %v1714
    %1760 = vmatpush1.bf16.msra.mxu0 %v1713
    %1761 = vmatprep.subr.bf16.mxu0 %v1717
    %1762 = vmatpush1.bf16.msra.mxu0 %v1716
    %1763 = vmatprep.subr.bf16.mxu0 %v1720
    %1764 = vmatpush1.bf16.msra.mxu0 %v1719
    %1765 = vmatprep.subr.bf16.mxu0 %v1723
    %1766 = vmatpush1.bf16.msra.mxu0 %v1722
    %1767 = vmatprep.subr.bf16.mxu0 %v1726
    %1768 = vmatpush1.bf16.msra.mxu0 %v1725
    %1769 = vmatprep.subr.bf16.mxu0 %v1729
    %1770 = vmatpush1.bf16.msra.mxu0 %v1728
    %1771 = vmatprep.subr.bf16.mxu0 0
    %1772 = vmatpush1.bf16.msra.mxu0 0
    %1773 = vmatprep.subr.bf16.mxu0 0
    %1774 = vmatpush1.bf16.msra.mxu0 0
    %1775 = vmatprep.subr.bf16.mxu0 0
    %1776 = vmatpush1.bf16.msra.mxu0 0
    %1777 = vmatprep.subr.bf16.mxu0 0
    %1778 = vmatpush1.bf16.msra.mxu0 0
    %1779 = vmatprep.subr.bf16.mxu0 0
    %1780 = vmatpush1.bf16.msra.mxu0 0
    %1781 = vmatprep.subr.bf16.mxu0 0
    %1782 = vmatpush1.bf16.msra.mxu0 0
    %1783 = vmatprep.subr.bf16.mxu0 0
    %1784 = vmatpush1.bf16.msra.mxu0 0
    %1785 = vmatprep.subr.bf16.mxu0 0
    %1786 = vmatpush1.bf16.msra.mxu0 0
    %1787 = vmatprep.mubr.bf16.mxu0 0
    %1788 = vmatmul.mubr.bf16.gmra.mrb[0].mxu0 %v1594
    %v1789 = vpop.f32.mrb[0].mxu0
    %v1790 = vadd.f32 0.0, %v1789
    %v1791 = vpop.f32.mrb[0].mxu0
    %v1792 = vadd.f32 0.0, %v1791
    %v1793 = vpop.f32.mrb[0].mxu0
    %v1794 = vpop.f32.mrb[0].mxu0
    %1795 = vdwg.mxu0
    %1796 = vmatprep.subr.bf16.mxu0 0
    %1797 = vmatpush1.bf16.msra.mxu0 %v1709
    %1798 = vmatprep.subr.bf16.mxu0 0
    %1799 = vmatpush1.bf16.msra.mxu0 %v1712
    %1800 = vmatprep.subr.bf16.mxu0 0
    %1801 = vmatpush1.bf16.msra.mxu0 %v1715
    %1802 = vmatprep.subr.bf16.mxu0 0
    %1803 = vmatpush1.bf16.msra.mxu0 %v1718
    %1804 = vmatprep.subr.bf16.mxu0 0
    %1805 = vmatpush1.bf16.msra.mxu0 %v1721
    %1806 = vmatprep.subr.bf16.mxu0 0
    %1807 = vmatpush1.bf16.msra.mxu0 %v1724
    %1808 = vmatprep.subr.bf16.mxu0 0
    %1809 = vmatpush1.bf16.msra.mxu0 %v1727
    %1810 = vmatprep.subr.bf16.mxu0 0
    %1811 = vmatpush1.bf16.msra.mxu0 %v1730
    %1812 = vmatprep.subr.bf16.mxu0 0
    %1813 = vmatpush1.bf16.msra.mxu0 0
    %1814 = vmatprep.subr.bf16.mxu0 0
    %1815 = vmatpush1.bf16.msra.mxu0 0
    %1816 = vmatprep.subr.bf16.mxu0 0
    %1817 = vmatpush1.bf16.msra.mxu0 0
    %1818 = vmatprep.subr.bf16.mxu0 0
    %1819 = vmatpush1.bf16.msra.mxu0 0
    %1820 = vmatprep.subr.bf16.mxu0 0
    %1821 = vmatpush1.bf16.msra.mxu0 0
    %1822 = vmatprep.subr.bf16.mxu0 0
    %1823 = vmatpush1.bf16.msra.mxu0 0
    %1824 = vmatprep.subr.bf16.mxu0 0
    %1825 = vmatpush1.bf16.msra.mxu0 0
    %1826 = vmatprep.subr.bf16.mxu0 0
    %1827 = vmatpush1.bf16.msra.mxu0 0
    %1828 = vmatprep.mubr.bf16.mxu0 0
    %1829 = vmatmul.mubr.bf16.gmra.mrb[0].mxu0 %v1594
    %v1830 = vpop.f32.mrb[0].mxu0
    %v1831 = vadd.f32 0.0, %v1830
    %v1832 = vpop.f32.mrb[0].mxu0
    %v1833 = vpop.f32.mrb[0].mxu0
    %v1834 = vpop.f32.mrb[0].mxu0
    %1835 = vdwg.mxu0
    %v1836 = vadd.f32 %v1591, %v1790
    %v1837 = vxor.u32 %v1836, 2147483648
    %v1838 = vmul.f32 %v1837, 1.442695
    %v1839 = vpow.pop %v1838
    %v1840 = vadd.f32 %v1839, 1.0
    %v1841 = vrcp.pop %v1840
    %v1842 = vmul.f32 1.0, %v1841
    %v1843 = vadd.f32 %v1592, %v1792
    %v1844 = vxor.u32 %v1843, 2147483648
    %v1845 = vmul.f32 %v1844, 1.442695
    %v1846 = vpow.pop %v1845
    %v1847 = vadd.f32 %v1846, 1.0
    %v1848 = vrcp.pop %v1847
    %v1849 = vmul.f32 1.0, %v1848
    %v1850 = vadd.f32 %v1831, %v499
    %v1851 = vmul.f32 %v1842, %v1850
    %v1852 = vadd.f32 %v1593, %v1851
    %v1853 = vtanh.pop %v1852
    %v1854 = vsub.f32 1.0, %v1849
    %v1855 = vmul.f32 %v1854, %v1853
    %v1856 = vmul.f32 %v1849, %v1585
    %v1857 = vadd.f32 %v1855, %v1856
    %s1858 = scalar_lea.vmem [#allocation12], 32
    %1859 = vst [vmem:[%s1858] sm:$0xff] %v1857
    %s1860 = smul.u32 5, 3
    %s1861 = smul.addr %s1860, 8
    %s1862 = scalar_lea.vmem [#allocation2], %s1861
    %v1863 = vld [vmem:[%s1862] sm:$0xff]
    %v1864 = vld [vmem:[%s1862 + $0x8] sm:$0xff]
    %v1865 = vld [vmem:[%s1862 + $0x10] sm:$0xff]
    %v1866 = vpack.c.bf16 %v1857, %v1857
    %v1867 = vld [vmem:[#allocation10] sm:$0xff]
    %v1868 = vld [vmem:[#allocation10 + $0x8] sm:$0xf]
    %v1869 = vld [vmem:[#allocation10 + $0xc] sm:$0xff]
    %v1870 = vld [vmem:[#allocation10 + $0x14] sm:$0xf]
    %v1871 = vld [vmem:[#allocation10 + $0x18] sm:$0xff]
    %v1872 = vld [vmem:[#allocation10 + $0x20] sm:$0xf]
    %v1873 = vld [vmem:[#allocation10 + $0x24] sm:$0xff]
    %v1874 = vld [vmem:[#allocation10 + $0x2c] sm:$0xf]
    %v1875 = vld [vmem:[#allocation10 + $0x30] sm:$0xff]
    %v1876 = vld [vmem:[#allocation10 + $0x38] sm:$0xf]
    %v1877 = vld [vmem:[#allocation10 + $0x3c] sm:$0xff]
    %v1878 = vld [vmem:[#allocation10 + $0x44] sm:$0xf]
    %v1879 = vld [vmem:[#allocation10 + $0x48] sm:$0xff]
    %v1880 = vld [vmem:[#allocation10 + $0x50] sm:$0xf]
    %v1881 = vld [vmem:[#allocation10 + $0x54] sm:$0xff]
    %v1882 = vld [vmem:[#allocation10 + $0x5c] sm:$0xf]
    %v1883 = vld [vmem:[#allocation10 + $0x60] sm:$0xff]
    %v1884 = vld [vmem:[#allocation10 + $0x68] sm:$0xf]
    %v1885 = vld [vmem:[#allocation10 + $0x6c] sm:$0xff]
    %v1886 = vld [vmem:[#allocation10 + $0x74] sm:$0xf]
    %v1887 = vld [vmem:[#allocation10 + $0x78] sm:$0xff]
    %v1888 = vld [vmem:[#allocation10 + $0x80] sm:$0xf]
    %v1889 = vld [vmem:[#allocation10 + $0x84] sm:$0xff]
    %v1890 = vld [vmem:[#allocation10 + $0x8c] sm:$0xf]
    %v1891 = vld [vmem:[#allocation10 + $0x90] sm:$0xff]
    %v1892 = vld [vmem:[#allocation10 + $0x98] sm:$0xf]
    %v1893 = vld [vmem:[#allocation10 + $0x9c] sm:$0xff]
    %v1894 = vld [vmem:[#allocation10 + $0xa4] sm:$0xf]
    %v1895 = vld [vmem:[#allocation10 + $0xa8] sm:$0xff]
    %v1896 = vld [vmem:[#allocation10 + $0xb0] sm:$0xf]
    %v1897 = vld [vmem:[#allocation10 + $0xb4] sm:$0xff]
    %v1898 = vld [vmem:[#allocation10 + $0xbc] sm:$0xf]
    %v1931 = vunpack.c.l.b16 %v1867
    %v1932 = vunpack.c.h.b16 %v1867
    %v1933 = vunpack.c.l.b16 %v1868
    %v1934 = vunpack.c.l.b16 %v1869
    %v1935 = vunpack.c.h.b16 %v1869
    %v1936 = vunpack.c.l.b16 %v1870
    %v1937 = vunpack.c.l.b16 %v1871
    %v1938 = vunpack.c.h.b16 %v1871
    %v1939 = vunpack.c.l.b16 %v1872
    %v1940 = vunpack.c.l.b16 %v1873
    %v1941 = vunpack.c.h.b16 %v1873
    %v1942 = vunpack.c.l.b16 %v1874
    %v1943 = vunpack.c.l.b16 %v1875
    %v1944 = vunpack.c.h.b16 %v1875
    %v1945 = vunpack.c.l.b16 %v1876
    %v1946 = vunpack.c.l.b16 %v1877
    %v1947 = vunpack.c.h.b16 %v1877
    %v1948 = vunpack.c.l.b16 %v1878
    %v1949 = vunpack.c.l.b16 %v1879
    %v1950 = vunpack.c.h.b16 %v1879
    %v1951 = vunpack.c.l.b16 %v1880
    %v1952 = vunpack.c.l.b16 %v1881
    %v1953 = vunpack.c.h.b16 %v1881
    %v1954 = vunpack.c.l.b16 %v1882
    %v1955 = vunpack.c.l.b16 %v1883
    %v1956 = vunpack.c.h.b16 %v1883
    %v1957 = vunpack.c.l.b16 %v1884
    %v1958 = vunpack.c.l.b16 %v1885
    %v1959 = vunpack.c.h.b16 %v1885
    %v1960 = vunpack.c.l.b16 %v1886
    %v1961 = vunpack.c.l.b16 %v1887
    %v1962 = vunpack.c.h.b16 %v1887
    %v1963 = vunpack.c.l.b16 %v1888
    %v1964 = vunpack.c.l.b16 %v1889
    %v1965 = vunpack.c.h.b16 %v1889
    %v1966 = vunpack.c.l.b16 %v1890
    %v1967 = vunpack.c.l.b16 %v1891
    %v1968 = vunpack.c.h.b16 %v1891
    %v1969 = vunpack.c.l.b16 %v1892
    %v1970 = vunpack.c.l.b16 %v1893
    %v1971 = vunpack.c.h.b16 %v1893
    %v1972 = vunpack.c.l.b16 %v1894
    %v1973 = vunpack.c.l.b16 %v1895
    %v1974 = vunpack.c.h.b16 %v1895
    %v1975 = vunpack.c.l.b16 %v1896
    %v1976 = vunpack.c.l.b16 %v1897
    %v1977 = vunpack.c.h.b16 %v1897
    %v1978 = vunpack.c.l.b16 %v1898
    %v1979 = vpack.c.b16 %v1934, %v1931
    %v1980 = vpack.c.b16 %v1935, %v1932
    %v1981 = vpack.c.b16 %v1936, %v1933
    %v1982 = vpack.c.b16 %v1940, %v1937
    %v1983 = vpack.c.b16 %v1941, %v1938
    %v1984 = vpack.c.b16 %v1942, %v1939
    %v1985 = vpack.c.b16 %v1946, %v1943
    %v1986 = vpack.c.b16 %v1947, %v1944
    %v1987 = vpack.c.b16 %v1948, %v1945
    %v1988 = vpack.c.b16 %v1952, %v1949
    %v1989 = vpack.c.b16 %v1953, %v1950
    %v1990 = vpack.c.b16 %v1954, %v1951
    %v1991 = vpack.c.b16 %v1958, %v1955
    %v1992 = vpack.c.b16 %v1959, %v1956
    %v1993 = vpack.c.b16 %v1960, %v1957
    %v1994 = vpack.c.b16 %v1964, %v1961
    %v1995 = vpack.c.b16 %v1965, %v1962
    %v1996 = vpack.c.b16 %v1966, %v1963
    %v1997 = vpack.c.b16 %v1970, %v1967
    %v1998 = vpack.c.b16 %v1971, %v1968
    %v1999 = vpack.c.b16 %v1972, %v1969
    %v2000 = vpack.c.b16 %v1976, %v1973
    %v2001 = vpack.c.b16 %v1977, %v1974
    %v2002 = vpack.c.b16 %v1978, %v1975
    %2027 = vmatprep.subr.bf16.mxu0 %v1980
    %2028 = vmatpush1.bf16.msra.mxu0 %v1979
    %2029 = vmatprep.subr.bf16.mxu0 %v1983
    %2030 = vmatpush1.bf16.msra.mxu0 %v1982
    %2031 = vmatprep.subr.bf16.mxu0 %v1986
    %2032 = vmatpush1.bf16.msra.mxu0 %v1985
    %2033 = vmatprep.subr.bf16.mxu0 %v1989
    %2034 = vmatpush1.bf16.msra.mxu0 %v1988
    %2035 = vmatprep.subr.bf16.mxu0 %v1992
    %2036 = vmatpush1.bf16.msra.mxu0 %v1991
    %2037 = vmatprep.subr.bf16.mxu0 %v1995
    %2038 = vmatpush1.bf16.msra.mxu0 %v1994
    %2039 = vmatprep.subr.bf16.mxu0 %v1998
    %2040 = vmatpush1.bf16.msra.mxu0 %v1997
    %2041 = vmatprep.subr.bf16.mxu0 %v2001
    %2042 = vmatpush1.bf16.msra.mxu0 %v2000
    %2043 = vmatprep.subr.bf16.mxu0 0
    %2044 = vmatpush1.bf16.msra.mxu0 0
    %2045 = vmatprep.subr.bf16.mxu0 0
    %2046 = vmatpush1.bf16.msra.mxu0 0
    %2047 = vmatprep.subr.bf16.mxu0 0
    %2048 = vmatpush1.bf16.msra.mxu0 0
    %2049 = vmatprep.subr.bf16.mxu0 0
    %2050 = vmatpush1.bf16.msra.mxu0 0
    %2051 = vmatprep.subr.bf16.mxu0 0
    %2052 = vmatpush1.bf16.msra.mxu0 0
    %2053 = vmatprep.subr.bf16.mxu0 0
    %2054 = vmatpush1.bf16.msra.mxu0 0
    %2055 = vmatprep.subr.bf16.mxu0 0
    %2056 = vmatpush1.bf16.msra.mxu0 0
    %2057 = vmatprep.subr.bf16.mxu0 0
    %2058 = vmatpush1.bf16.msra.mxu0 0
    %2059 = vmatprep.mubr.bf16.mxu0 0
    %2060 = vmatmul.mubr.bf16.gmra.mrb[0].mxu0 %v1866
    %v2061 = vpop.f32.mrb[0].mxu0
    %v2062 = vadd.f32 0.0, %v2061
    %v2063 = vpop.f32.mrb[0].mxu0
    %v2064 = vadd.f32 0.0, %v2063
    %v2065 = vpop.f32.mrb[0].mxu0
    %v2066 = vpop.f32.mrb[0].mxu0
    %2067 = vdwg.mxu0
    %2068 = vmatprep.subr.bf16.mxu0 0
    %2069 = vmatpush1.bf16.msra.mxu0 %v1981
    %2070 = vmatprep.subr.bf16.mxu0 0
    %2071 = vmatpush1.bf16.msra.mxu0 %v1984
    %2072 = vmatprep.subr.bf16.mxu0 0
    %2073 = vmatpush1.bf16.msra.mxu0 %v1987
    %2074 = vmatprep.subr.bf16.mxu0 0
    %2075 = vmatpush1.bf16.msra.mxu0 %v1990
    %2076 = vmatprep.subr.bf16.mxu0 0
    %2077 = vmatpush1.bf16.msra.mxu0 %v1993
    %2078 = vmatprep.subr.bf16.mxu0 0
    %2079 = vmatpush1.bf16.msra.mxu0 %v1996
    %2080 = vmatprep.subr.bf16.mxu0 0
    %2081 = vmatpush1.bf16.msra.mxu0 %v1999
    %2082 = vmatprep.subr.bf16.mxu0 0
    %2083 = vmatpush1.bf16.msra.mxu0 %v2002
    %2084 = vmatprep.subr.bf16.mxu0 0
    %2085 = vmatpush1.bf16.msra.mxu0 0
    %2086 = vmatprep.subr.bf16.mxu0 0
    %2087 = vmatpush1.bf16.msra.mxu0 0
    %2088 = vmatprep.subr.bf16.mxu0 0
    %2089 = vmatpush1.bf16.msra.mxu0 0
    %2090 = vmatprep.subr.bf16.mxu0 0
    %2091 = vmatpush1.bf16.msra.mxu0 0
    %2092 = vmatprep.subr.bf16.mxu0 0
    %2093 = vmatpush1.bf16.msra.mxu0 0
    %2094 = vmatprep.subr.bf16.mxu0 0
    %2095 = vmatpush1.bf16.msra.mxu0 0
    %2096 = vmatprep.subr.bf16.mxu0 0
    %2097 = vmatpush1.bf16.msra.mxu0 0
    %2098 = vmatprep.subr.bf16.mxu0 0
    %2099 = vmatpush1.bf16.msra.mxu0 0
    %2100 = vmatprep.mubr.bf16.mxu0 0
    %2101 = vmatmul.mubr.bf16.gmra.mrb[0].mxu0 %v1866
    %v2102 = vpop.f32.mrb[0].mxu0
    %v2103 = vadd.f32 0.0, %v2102
    %v2104 = vpop.f32.mrb[0].mxu0
    %v2105 = vpop.f32.mrb[0].mxu0
    %v2106 = vpop.f32.mrb[0].mxu0
    %2107 = vdwg.mxu0
    %v2108 = vadd.f32 %v1863, %v2062
    %v2109 = vxor.u32 %v2108, 2147483648
    %v2110 = vmul.f32 %v2109, 1.442695
    %v2111 = vpow.pop %v2110
    %v2112 = vadd.f32 %v2111, 1.0
    %v2113 = vrcp.pop %v2112
    %v2114 = vmul.f32 1.0, %v2113
    %v2115 = vadd.f32 %v1864, %v2064
    %v2116 = vxor.u32 %v2115, 2147483648
    %v2117 = vmul.f32 %v2116, 1.442695
    %v2118 = vpow.pop %v2117
    %v2119 = vadd.f32 %v2118, 1.0
    %v2120 = vrcp.pop %v2119
    %v2121 = vmul.f32 1.0, %v2120
    %v2122 = vadd.f32 %v2103, %v499
    %v2123 = vmul.f32 %v2114, %v2122
    %v2124 = vadd.f32 %v1865, %v2123
    %v2125 = vtanh.pop %v2124
    %v2126 = vsub.f32 1.0, %v2121
    %v2127 = vmul.f32 %v2126, %v2125
    %v2128 = vmul.f32 %v2121, %v1857
    %v2129 = vadd.f32 %v2127, %v2128
    %s2130 = scalar_lea.vmem [#allocation12], 40
    %2131 = vst [vmem:[%s2130] sm:$0xff] %v2129
    %s2132 = smul.u32 6, 3
    %s2133 = smul.addr %s2132, 8
    %s2134 = scalar_lea.vmem [#allocation2], %s2133
    %v2135 = vld [vmem:[%s2134] sm:$0xff]
    %v2136 = vld [vmem:[%s2134 + $0x8] sm:$0xff]
    %v2137 = vld [vmem:[%s2134 + $0x10] sm:$0xff]
    %v2138 = vpack.c.bf16 %v2129, %v2129
    %v2139 = vld [vmem:[#allocation10] sm:$0xff]
    %v2140 = vld [vmem:[#allocation10 + $0x8] sm:$0xf]
    %v2141 = vld [vmem:[#allocation10 + $0xc] sm:$0xff]
    %v2142 = vld [vmem:[#allocation10 + $0x14] sm:$0xf]
    %v2143 = vld [vmem:[#allocation10 + $0x18] sm:$0xff]
    %v2144 = vld [vmem:[#allocation10 + $0x20] sm:$0xf]
    %v2145 = vld [vmem:[#allocation10 + $0x24] sm:$0xff]
    %v2146 = vld [vmem:[#allocation10 + $0x2c] sm:$0xf]
    %v2147 = vld [vmem:[#allocation10 + $0x30] sm:$0xff]
    %v2148 = vld [vmem:[#allocation10 + $0x38] sm:$0xf]
    %v2149 = vld [vmem:[#allocation10 + $0x3c] sm:$0xff]
    %v2150 = vld [vmem:[#allocation10 + $0x44] sm:$0xf]
    %v2151 = vld [vmem:[#allocation10 + $0x48] sm:$0xff]
    %v2152 = vld [vmem:[#allocation10 + $0x50] sm:$0xf]
    %v2153 = vld [vmem:[#allocation10 + $0x54] sm:$0xff]
    %v2154 = vld [vmem:[#allocation10 + $0x5c] sm:$0xf]
    %v2155 = vld [vmem:[#allocation10 + $0x60] sm:$0xff]
    %v2156 = vld [vmem:[#allocation10 + $0x68] sm:$0xf]
    %v2157 = vld [vmem:[#allocation10 + $0x6c] sm:$0xff]
    %v2158 = vld [vmem:[#allocation10 + $0x74] sm:$0xf]
    %v2159 = vld [vmem:[#allocation10 + $0x78] sm:$0xff]
    %v2160 = vld [vmem:[#allocation10 + $0x80] sm:$0xf]
    %v2161 = vld [vmem:[#allocation10 + $0x84] sm:$0xff]
    %v2162 = vld [vmem:[#allocation10 + $0x8c] sm:$0xf]
    %v2163 = vld [vmem:[#allocation10 + $0x90] sm:$0xff]
    %v2164 = vld [vmem:[#allocation10 + $0x98] sm:$0xf]
    %v2165 = vld [vmem:[#allocation10 + $0x9c] sm:$0xff]
    %v2166 = vld [vmem:[#allocation10 + $0xa4] sm:$0xf]
    %v2167 = vld [vmem:[#allocation10 + $0xa8] sm:$0xff]
    %v2168 = vld [vmem:[#allocation10 + $0xb0] sm:$0xf]
    %v2169 = vld [vmem:[#allocation10 + $0xb4] sm:$0xff]
    %v2170 = vld [vmem:[#allocation10 + $0xbc] sm:$0xf]
    %v2203 = vunpack.c.l.b16 %v2139
    %v2204 = vunpack.c.h.b16 %v2139
    %v2205 = vunpack.c.l.b16 %v2140
    %v2206 = vunpack.c.l.b16 %v2141
    %v2207 = vunpack.c.h.b16 %v2141
    %v2208 = vunpack.c.l.b16 %v2142
    %v2209 = vunpack.c.l.b16 %v2143
    %v2210 = vunpack.c.h.b16 %v2143
    %v2211 = vunpack.c.l.b16 %v2144
    %v2212 = vunpack.c.l.b16 %v2145
    %v2213 = vunpack.c.h.b16 %v2145
    %v2214 = vunpack.c.l.b16 %v2146
    %v2215 = vunpack.c.l.b16 %v2147
    %v2216 = vunpack.c.h.b16 %v2147
    %v2217 = vunpack.c.l.b16 %v2148
    %v2218 = vunpack.c.l.b16 %v2149
    %v2219 = vunpack.c.h.b16 %v2149
    %v2220 = vunpack.c.l.b16 %v2150
    %v2221 = vunpack.c.l.b16 %v2151
    %v2222 = vunpack.c.h.b16 %v2151
    %v2223 = vunpack.c.l.b16 %v2152
    %v2224 = vunpack.c.l.b16 %v2153
    %v2225 = vunpack.c.h.b16 %v2153
    %v2226 = vunpack.c.l.b16 %v2154
    %v2227 = vunpack.c.l.b16 %v2155
    %v2228 = vunpack.c.h.b16 %v2155
    %v2229 = vunpack.c.l.b16 %v2156
    %v2230 = vunpack.c.l.b16 %v2157
    %v2231 = vunpack.c.h.b16 %v2157
    %v2232 = vunpack.c.l.b16 %v2158
    %v2233 = vunpack.c.l.b16 %v2159
    %v2234 = vunpack.c.h.b16 %v2159
    %v2235 = vunpack.c.l.b16 %v2160
    %v2236 = vunpack.c.l.b16 %v2161
    %v2237 = vunpack.c.h.b16 %v2161
    %v2238 = vunpack.c.l.b16 %v2162
    %v2239 = vunpack.c.l.b16 %v2163
    %v2240 = vunpack.c.h.b16 %v2163
    %v2241 = vunpack.c.l.b16 %v2164
    %v2242 = vunpack.c.l.b16 %v2165
    %v2243 = vunpack.c.h.b16 %v2165
    %v2244 = vunpack.c.l.b16 %v2166
    %v2245 = vunpack.c.l.b16 %v2167
    %v2246 = vunpack.c.h.b16 %v2167
    %v2247 = vunpack.c.l.b16 %v2168
    %v2248 = vunpack.c.l.b16 %v2169
    %v2249 = vunpack.c.h.b16 %v2169
    %v2250 = vunpack.c.l.b16 %v2170
    %v2251 = vpack.c.b16 %v2206, %v2203
    %v2252 = vpack.c.b16 %v2207, %v2204
    %v2253 = vpack.c.b16 %v2208, %v2205
    %v2254 = vpack.c.b16 %v2212, %v2209
    %v2255 = vpack.c.b16 %v2213, %v2210
    %v2256 = vpack.c.b16 %v2214, %v2211
    %v2257 = vpack.c.b16 %v2218, %v2215
    %v2258 = vpack.c.b16 %v2219, %v2216
    %v2259 = vpack.c.b16 %v2220, %v2217
    %v2260 = vpack.c.b16 %v2224, %v2221
    %v2261 = vpack.c.b16 %v2225, %v2222
    %v2262 = vpack.c.b16 %v2226, %v2223
    %v2263 = vpack.c.b16 %v2230, %v2227
    %v2264 = vpack.c.b16 %v2231, %v2228
    %v2265 = vpack.c.b16 %v2232, %v2229
    %v2266 = vpack.c.b16 %v2236, %v2233
    %v2267 = vpack.c.b16 %v2237, %v2234
    %v2268 = vpack.c.b16 %v2238, %v2235
    %v2269 = vpack.c.b16 %v2242, %v2239
    %v2270 = vpack.c.b16 %v2243, %v2240
    %v2271 = vpack.c.b16 %v2244, %v2241
    %v2272 = vpack.c.b16 %v2248, %v2245
    %v2273 = vpack.c.b16 %v2249, %v2246
    %v2274 = vpack.c.b16 %v2250, %v2247
    %2299 = vmatprep.subr.bf16.mxu0 %v2252
    %2300 = vmatpush1.bf16.msra.mxu0 %v2251
    %2301 = vmatprep.subr.bf16.mxu0 %v2255
    %2302 = vmatpush1.bf16.msra.mxu0 %v2254
    %2303 = vmatprep.subr.bf16.mxu0 %v2258
    %2304 = vmatpush1.bf16.msra.mxu0 %v2257
    %2305 = vmatprep.subr.bf16.mxu0 %v2261
    %2306 = vmatpush1.bf16.msra.mxu0 %v2260
    %2307 = vmatprep.subr.bf16.mxu0 %v2264
    %2308 = vmatpush1.bf16.msra.mxu0 %v2263
    %2309 = vmatprep.subr.bf16.mxu0 %v2267
    %2310 = vmatpush1.bf16.msra.mxu0 %v2266
    %2311 = vmatprep.subr.bf16.mxu0 %v2270
    %2312 = vmatpush1.bf16.msra.mxu0 %v2269
    %2313 = vmatprep.subr.bf16.mxu0 %v2273
    %2314 = vmatpush1.bf16.msra.mxu0 %v2272
    %2315 = vmatprep.subr.bf16.mxu0 0
    %2316 = vmatpush1.bf16.msra.mxu0 0
    %2317 = vmatprep.subr.bf16.mxu0 0
    %2318 = vmatpush1.bf16.msra.mxu0 0
    %2319 = vmatprep.subr.bf16.mxu0 0
    %2320 = vmatpush1.bf16.msra.mxu0 0
    %2321 = vmatprep.subr.bf16.mxu0 0
    %2322 = vmatpush1.bf16.msra.mxu0 0
    %2323 = vmatprep.subr.bf16.mxu0 0
    %2324 = vmatpush1.bf16.msra.mxu0 0
    %2325 = vmatprep.subr.bf16.mxu0 0
    %2326 = vmatpush1.bf16.msra.mxu0 0
    %2327 = vmatprep.subr.bf16.mxu0 0
    %2328 = vmatpush1.bf16.msra.mxu0 0
    %2329 = vmatprep.subr.bf16.mxu0 0
    %2330 = vmatpush1.bf16.msra.mxu0 0
    %2331 = vmatprep.mubr.bf16.mxu0 0
    %2332 = vmatmul.mubr.bf16.gmra.mrb[0].mxu0 %v2138
    %v2333 = vpop.f32.mrb[0].mxu0
    %v2334 = vadd.f32 0.0, %v2333
    %v2335 = vpop.f32.mrb[0].mxu0
    %v2336 = vadd.f32 0.0, %v2335
    %v2337 = vpop.f32.mrb[0].mxu0
    %v2338 = vpop.f32.mrb[0].mxu0
    %2339 = vdwg.mxu0
    %2340 = vmatprep.subr.bf16.mxu0 0
    %2341 = vmatpush1.bf16.msra.mxu0 %v2253
    %2342 = vmatprep.subr.bf16.mxu0 0
    %2343 = vmatpush1.bf16.msra.mxu0 %v2256
    %2344 = vmatprep.subr.bf16.mxu0 0
    %2345 = vmatpush1.bf16.msra.mxu0 %v2259
    %2346 = vmatprep.subr.bf16.mxu0 0
    %2347 = vmatpush1.bf16.msra.mxu0 %v2262
    %2348 = vmatprep.subr.bf16.mxu0 0
    %2349 = vmatpush1.bf16.msra.mxu0 %v2265
    %2350 = vmatprep.subr.bf16.mxu0 0
    %2351 = vmatpush1.bf16.msra.mxu0 %v2268
    %2352 = vmatprep.subr.bf16.mxu0 0
    %2353 = vmatpush1.bf16.msra.mxu0 %v2271
    %2354 = vmatprep.subr.bf16.mxu0 0
    %2355 = vmatpush1.bf16.msra.mxu0 %v2274
    %2356 = vmatprep.subr.bf16.mxu0 0
    %2357 = vmatpush1.bf16.msra.mxu0 0
    %2358 = vmatprep.subr.bf16.mxu0 0
    %2359 = vmatpush1.bf16.msra.mxu0 0
    %2360 = vmatprep.subr.bf16.mxu0 0
    %2361 = vmatpush1.bf16.msra.mxu0 0
    %2362 = vmatprep.subr.bf16.mxu0 0
    %2363 = vmatpush1.bf16.msra.mxu0 0
    %2364 = vmatprep.subr.bf16.mxu0 0
    %2365 = vmatpush1.bf16.msra.mxu0 0
    %2366 = vmatprep.subr.bf16.mxu0 0
    %2367 = vmatpush1.bf16.msra.mxu0 0
    %2368 = vmatprep.subr.bf16.mxu0 0
    %2369 = vmatpush1.bf16.msra.mxu0 0
    %2370 = vmatprep.subr.bf16.mxu0 0
    %2371 = vmatpush1.bf16.msra.mxu0 0
    %2372 = vmatprep.mubr.bf16.mxu0 0
    %2373 = vmatmul.mubr.bf16.gmra.mrb[0].mxu0 %v2138
    %v2374 = vpop.f32.mrb[0].mxu0
    %v2375 = vadd.f32 0.0, %v2374
    %v2376 = vpop.f32.mrb[0].mxu0
    %v2377 = vpop.f32.mrb[0].mxu0
    %v2378 = vpop.f32.mrb[0].mxu0
    %2379 = vdwg.mxu0
    %v2380 = vadd.f32 %v2135, %v2334
    %v2381 = vxor.u32 %v2380, 2147483648
    %v2382 = vmul.f32 %v2381, 1.442695
    %v2383 = vpow.pop %v2382
    %v2384 = vadd.f32 %v2383, 1.0
    %v2385 = vrcp.pop %v2384
    %v2386 = vmul.f32 1.0, %v2385
    %v2387 = vadd.f32 %v2136, %v2336
    %v2388 = vxor.u32 %v2387, 2147483648
    %v2389 = vmul.f32 %v2388, 1.442695
    %v2390 = vpow.pop %v2389
    %v2391 = vadd.f32 %v2390, 1.0
    %v2392 = vrcp.pop %v2391
    %v2393 = vmul.f32 1.0, %v2392
    %v2394 = vadd.f32 %v2375, %v499
    %v2395 = vmul.f32 %v2386, %v2394
    %v2396 = vadd.f32 %v2137, %v2395
    %v2397 = vtanh.pop %v2396
    %v2398 = vsub.f32 1.0, %v2393
    %v2399 = vmul.f32 %v2398, %v2397
    %v2400 = vmul.f32 %v2393, %v2129
    %v2401 = vadd.f32 %v2399, %v2400
    %s2402 = scalar_lea.vmem [#allocation12], 48
    %2403 = vst [vmem:[%s2402] sm:$0xff] %v2401
    %s2404 = smul.u32 7, 3
    %s2405 = smul.addr %s2404, 8
    %s2406 = scalar_lea.vmem [#allocation2], %s2405
    %v2407 = vld [vmem:[%s2406] sm:$0xff]
    %v2408 = vld [vmem:[%s2406 + $0x8] sm:$0xff]
    %v2409 = vld [vmem:[%s2406 + $0x10] sm:$0xff]
    %v2410 = vpack.c.bf16 %v2401, %v2401
    %v2411 = vld [vmem:[#allocation10] sm:$0xff]
    %v2412 = vld [vmem:[#allocation10 + $0x8] sm:$0xf]
    %v2413 = vld [vmem:[#allocation10 + $0xc] sm:$0xff]
    %v2414 = vld [vmem:[#allocation10 + $0x14] sm:$0xf]
    %v2415 = vld [vmem:[#allocation10 + $0x18] sm:$0xff]
    %v2416 = vld [vmem:[#allocation10 + $0x20] sm:$0xf]
    %v2417 = vld [vmem:[#allocation10 + $0x24] sm:$0xff]
    %v2418 = vld [vmem:[#allocation10 + $0x2c] sm:$0xf]
    %v2419 = vld [vmem:[#allocation10 + $0x30] sm:$0xff]
    %v2420 = vld [vmem:[#allocation10 + $0x38] sm:$0xf]
    %v2421 = vld [vmem:[#allocation10 + $0x3c] sm:$0xff]
    %v2422 = vld [vmem:[#allocation10 + $0x44] sm:$0xf]
    %v2423 = vld [vmem:[#allocation10 + $0x48] sm:$0xff]
    %v2424 = vld [vmem:[#allocation10 + $0x50] sm:$0xf]
    %v2425 = vld [vmem:[#allocation10 + $0x54] sm:$0xff]
    %v2426 = vld [vmem:[#allocation10 + $0x5c] sm:$0xf]
    %v2427 = vld [vmem:[#allocation10 + $0x60] sm:$0xff]
    %v2428 = vld [vmem:[#allocation10 + $0x68] sm:$0xf]
    %v2429 = vld [vmem:[#allocation10 + $0x6c] sm:$0xff]
    %v2430 = vld [vmem:[#allocation10 + $0x74] sm:$0xf]
    %v2431 = vld [vmem:[#allocation10 + $0x78] sm:$0xff]
    %v2432 = vld [vmem:[#allocation10 + $0x80] sm:$0xf]
    %v2433 = vld [vmem:[#allocation10 + $0x84] sm:$0xff]
    %v2434 = vld [vmem:[#allocation10 + $0x8c] sm:$0xf]
    %v2435 = vld [vmem:[#allocation10 + $0x90] sm:$0xff]
    %v2436 = vld [vmem:[#allocation10 + $0x98] sm:$0xf]
    %v2437 = vld [vmem:[#allocation10 + $0x9c] sm:$0xff]
    %v2438 = vld [vmem:[#allocation10 + $0xa4] sm:$0xf]
    %v2439 = vld [vmem:[#allocation10 + $0xa8] sm:$0xff]
    %v2440 = vld [vmem:[#allocation10 + $0xb0] sm:$0xf]
    %v2441 = vld [vmem:[#allocation10 + $0xb4] sm:$0xff]
    %v2442 = vld [vmem:[#allocation10 + $0xbc] sm:$0xf]
    %v2475 = vunpack.c.l.b16 %v2411
    %v2476 = vunpack.c.h.b16 %v2411
    %v2477 = vunpack.c.l.b16 %v2412
    %v2478 = vunpack.c.l.b16 %v2413
    %v2479 = vunpack.c.h.b16 %v2413
    %v2480 = vunpack.c.l.b16 %v2414
    %v2481 = vunpack.c.l.b16 %v2415
    %v2482 = vunpack.c.h.b16 %v2415
    %v2483 = vunpack.c.l.b16 %v2416
    %v2484 = vunpack.c.l.b16 %v2417
    %v2485 = vunpack.c.h.b16 %v2417
    %v2486 = vunpack.c.l.b16 %v2418
    %v2487 = vunpack.c.l.b16 %v2419
    %v2488 = vunpack.c.h.b16 %v2419
    %v2489 = vunpack.c.l.b16 %v2420
    %v2490 = vunpack.c.l.b16 %v2421
    %v2491 = vunpack.c.h.b16 %v2421
    %v2492 = vunpack.c.l.b16 %v2422
    %v2493 = vunpack.c.l.b16 %v2423
    %v2494 = vunpack.c.h.b16 %v2423
    %v2495 = vunpack.c.l.b16 %v2424
    %v2496 = vunpack.c.l.b16 %v2425
    %v2497 = vunpack.c.h.b16 %v2425
    %v2498 = vunpack.c.l.b16 %v2426
    %v2499 = vunpack.c.l.b16 %v2427
    %v2500 = vunpack.c.h.b16 %v2427
    %v2501 = vunpack.c.l.b16 %v2428
    %v2502 = vunpack.c.l.b16 %v2429
    %v2503 = vunpack.c.h.b16 %v2429
    %v2504 = vunpack.c.l.b16 %v2430
    %v2505 = vunpack.c.l.b16 %v2431
    %v2506 = vunpack.c.h.b16 %v2431
    %v2507 = vunpack.c.l.b16 %v2432
    %v2508 = vunpack.c.l.b16 %v2433
    %v2509 = vunpack.c.h.b16 %v2433
    %v2510 = vunpack.c.l.b16 %v2434
    %v2511 = vunpack.c.l.b16 %v2435
    %v2512 = vunpack.c.h.b16 %v2435
    %v2513 = vunpack.c.l.b16 %v2436
    %v2514 = vunpack.c.l.b16 %v2437
    %v2515 = vunpack.c.h.b16 %v2437
    %v2516 = vunpack.c.l.b16 %v2438
    %v2517 = vunpack.c.l.b16 %v2439
    %v2518 = vunpack.c.h.b16 %v2439
    %v2519 = vunpack.c.l.b16 %v2440
    %v2520 = vunpack.c.l.b16 %v2441
    %v2521 = vunpack.c.h.b16 %v2441
    %v2522 = vunpack.c.l.b16 %v2442
    %v2523 = vpack.c.b16 %v2478, %v2475
    %v2524 = vpack.c.b16 %v2479, %v2476
    %v2525 = vpack.c.b16 %v2480, %v2477
    %v2526 = vpack.c.b16 %v2484, %v2481
    %v2527 = vpack.c.b16 %v2485, %v2482
    %v2528 = vpack.c.b16 %v2486, %v2483
    %v2529 = vpack.c.b16 %v2490, %v2487
    %v2530 = vpack.c.b16 %v2491, %v2488
    %v2531 = vpack.c.b16 %v2492, %v2489
    %v2532 = vpack.c.b16 %v2496, %v2493
    %v2533 = vpack.c.b16 %v2497, %v2494
    %v2534 = vpack.c.b16 %v2498, %v2495
    %v2535 = vpack.c.b16 %v2502, %v2499
    %v2536 = vpack.c.b16 %v2503, %v2500
    %v2537 = vpack.c.b16 %v2504, %v2501
    %v2538 = vpack.c.b16 %v2508, %v2505
    %v2539 = vpack.c.b16 %v2509, %v2506
    %v2540 = vpack.c.b16 %v2510, %v2507
    %v2541 = vpack.c.b16 %v2514, %v2511
    %v2542 = vpack.c.b16 %v2515, %v2512
    %v2543 = vpack.c.b16 %v2516, %v2513
    %v2544 = vpack.c.b16 %v2520, %v2517
    %v2545 = vpack.c.b16 %v2521, %v2518
    %v2546 = vpack.c.b16 %v2522, %v2519
    %2571 = vmatprep.subr.bf16.mxu0 %v2524
    %2572 = vmatpush1.bf16.msra.mxu0 %v2523
    %2573 = vmatprep.subr.bf16.mxu0 %v2527
    %2574 = vmatpush1.bf16.msra.mxu0 %v2526
    %2575 = vmatprep.subr.bf16.mxu0 %v2530
    %2576 = vmatpush1.bf16.msra.mxu0 %v2529
    %2577 = vmatprep.subr.bf16.mxu0 %v2533
    %2578 = vmatpush1.bf16.msra.mxu0 %v2532
    %2579 = vmatprep.subr.bf16.mxu0 %v2536
    %2580 = vmatpush1.bf16.msra.mxu0 %v2535
    %2581 = vmatprep.subr.bf16.mxu0 %v2539
    %2582 = vmatpush1.bf16.msra.mxu0 %v2538
    %2583 = vmatprep.subr.bf16.mxu0 %v2542
    %2584 = vmatpush1.bf16.msra.mxu0 %v2541
    %2585 = vmatprep.subr.bf16.mxu0 %v2545
    %2586 = vmatpush1.bf16.msra.mxu0 %v2544
    %2587 = vmatprep.subr.bf16.mxu0 0
    %2588 = vmatpush1.bf16.msra.mxu0 0
    %2589 = vmatprep.subr.bf16.mxu0 0
    %2590 = vmatpush1.bf16.msra.mxu0 0
    %2591 = vmatprep.subr.bf16.mxu0 0
    %2592 = vmatpush1.bf16.msra.mxu0 0
    %2593 = vmatprep.subr.bf16.mxu0 0
    %2594 = vmatpush1.bf16.msra.mxu0 0
    %2595 = vmatprep.subr.bf16.mxu0 0
    %2596 = vmatpush1.bf16.msra.mxu0 0
    %2597 = vmatprep.subr.bf16.mxu0 0
    %2598 = vmatpush1.bf16.msra.mxu0 0
    %2599 = vmatprep.subr.bf16.mxu0 0
    %2600 = vmatpush1.bf16.msra.mxu0 0
    %2601 = vmatprep.subr.bf16.mxu0 0
    %2602 = vmatpush1.bf16.msra.mxu0 0
    %2603 = vmatprep.mubr.bf16.mxu0 0
    %2604 = vmatmul.mubr.bf16.gmra.mrb[0].mxu0 %v2410
    %v2605 = vpop.f32.mrb[0].mxu0
    %v2606 = vadd.f32 0.0, %v2605
    %v2607 = vpop.f32.mrb[0].mxu0
    %v2608 = vadd.f32 0.0, %v2607
    %v2609 = vpop.f32.mrb[0].mxu0
    %v2610 = vpop.f32.mrb[0].mxu0
    %2611 = vdwg.mxu0
    %2612 = vmatprep.subr.bf16.mxu0 0
    %2613 = vmatpush1.bf16.msra.mxu0 %v2525
    %2614 = vmatprep.subr.bf16.mxu0 0
    %2615 = vmatpush1.bf16.msra.mxu0 %v2528
    %2616 = vmatprep.subr.bf16.mxu0 0
    %2617 = vmatpush1.bf16.msra.mxu0 %v2531
    %2618 = vmatprep.subr.bf16.mxu0 0
    %2619 = vmatpush1.bf16.msra.mxu0 %v2534
    %2620 = vmatprep.subr.bf16.mxu0 0
    %2621 = vmatpush1.bf16.msra.mxu0 %v2537
    %2622 = vmatprep.subr.bf16.mxu0 0
    %2623 = vmatpush1.bf16.msra.mxu0 %v2540
    %2624 = vmatprep.subr.bf16.mxu0 0
    %2625 = vmatpush1.bf16.msra.mxu0 %v2543
    %2626 = vmatprep.subr.bf16.mxu0 0
    %2627 = vmatpush1.bf16.msra.mxu0 %v2546
    %2628 = vmatprep.subr.bf16.mxu0 0
    %2629 = vmatpush1.bf16.msra.mxu0 0
    %2630 = vmatprep.subr.bf16.mxu0 0
    %2631 = vmatpush1.bf16.msra.mxu0 0
    %2632 = vmatprep.subr.bf16.mxu0 0
    %2633 = vmatpush1.bf16.msra.mxu0 0
    %2634 = vmatprep.subr.bf16.mxu0 0
    %2635 = vmatpush1.bf16.msra.mxu0 0
    %2636 = vmatprep.subr.bf16.mxu0 0
    %2637 = vmatpush1.bf16.msra.mxu0 0
    %2638 = vmatprep.subr.bf16.mxu0 0
    %2639 = vmatpush1.bf16.msra.mxu0 0
    %2640 = vmatprep.subr.bf16.mxu0 0
    %2641 = vmatpush1.bf16.msra.mxu0 0
    %2642 = vmatprep.subr.bf16.mxu0 0
    %2643 = vmatpush1.bf16.msra.mxu0 0
    %2644 = vmatprep.mubr.bf16.mxu0 0
    %2645 = vmatmul.mubr.bf16.gmra.mrb[0].mxu0 %v2410
    %v2646 = vpop.f32.mrb[0].mxu0
    %v2647 = vadd.f32 0.0, %v2646
    %v2648 = vpop.f32.mrb[0].mxu0
    %v2649 = vpop.f32.mrb[0].mxu0
    %v2650 = vpop.f32.mrb[0].mxu0
    %2651 = vdwg.mxu0
    %v2652 = vadd.f32 %v2407, %v2606
    %v2653 = vxor.u32 %v2652, 2147483648
    %v2654 = vmul.f32 %v2653, 1.442695
    %v2655 = vpow.pop %v2654
    %v2656 = vadd.f32 %v2655, 1.0
    %v2657 = vrcp.pop %v2656
    %v2658 = vmul.f32 1.0, %v2657
    %v2659 = vadd.f32 %v2408, %v2608
    %v2660 = vxor.u32 %v2659, 2147483648
    %v2661 = vmul.f32 %v2660, 1.442695
    %v2662 = vpow.pop %v2661
    %v2663 = vadd.f32 %v2662, 1.0
    %v2664 = vrcp.pop %v2663
    %v2665 = vmul.f32 1.0, %v2664
    %v2666 = vadd.f32 %v2647, %v499
    %v2667 = vmul.f32 %v2658, %v2666
    %v2668 = vadd.f32 %v2409, %v2667
    %v2669 = vtanh.pop %v2668
    %v2670 = vsub.f32 1.0, %v2665
    %v2671 = vmul.f32 %v2670, %v2669
    %v2672 = vmul.f32 %v2665, %v2401
    %v2673 = vadd.f32 %v2671, %v2672
    %s2674 = scalar_lea.vmem [#allocation12], 56
    %2675 = vst [vmem:[%s2674] sm:$0xff] %v2673
    %2676 = vst [vmem:[#allocation3] sm:$0xff] %v2673
    // Predicated region
    $region46: #{tpu_custom_call.1} parent=1 // pred_check
      _
    $region47: #{tpu_custom_call.1} parent=1 // pred_check_branch
      %2678 = sbr.rel (0) target = $region49
    $region48: #{tpu_custom_call.1} parent=1 // pred_region
      %s2680 = ssub.s32 1024, 1024
      %2681 = vsyncadd [#allocation6], %s2680
      %s2682 = sshll.u32 [#allocation12], 4
      %s2683 = int_to_ptr.vmem [resolvable:$true] %s2682
      %2688 = dma.vmem_to_hbm [thread:$0]  %s2683, 1024, %s6, [#allocation6], 128, 128, 8
    $region49: #{tpu_custom_call.1} parent=1 // pred_fallthru
      _
    // Predicated region
    $region50: #{tpu_custom_call.1} parent=1 // pred_check
      _
    $region51: #{tpu_custom_call.1} parent=1 // pred_check_branch
      %2690 = sbr.rel (0) target = $region53
    $region52: #{tpu_custom_call.1} parent=1 // pred_region
      %2691 = dma.done [#allocation6], 1024
    $region53: #{tpu_custom_call.1} parent=1 // pred_fallthru
      _
    %2692 = vsyncpa [#allocation5], 1
    %2693 = vsyncpa [#allocation8], 1
    %2694 = vsyncpa [#allocation11], 1
    %2695 = vsyncpa [#allocation6], 1

</llo_original>
